<compile_context>
chip_gen: v7x
topology: tpu7x:2x2x1
jax: 0.10.0
libtpu: 0.0.40
codegen_flags: <defaults>
</compile_context>

<pallas_src>
import math
from functools import partial

import jax
import jax.numpy as jnp
from jax.experimental import pallas as pl
from jax.experimental.pallas import tpu as pltpu

EPS = 1e-5            # nn.BatchNorm2d default eps
SLOPE = 0.01          # nn.LeakyReLU default negative_slope
COL_TILE = 512        # lane-dense column tile (multiple of 128)
VMEM_LIMIT = 32 * 1024 * 1024   # safe scoped-VMEM ceiling on v5e/v6e/v7x for these tiles


def _round_up(x, m):
    return (x + m - 1) // m * m


def _compiler_params():
    return pltpu.CompilerParams(
        dimension_semantics=("parallel",),
        vmem_limit_bytes=VMEM_LIMIT,
    )


# ----------------------------------------------------------------------------
# Pallas kernels
# ----------------------------------------------------------------------------
def _matmul_stats_kernel(w_ref, x_ref, y_ref, sum_ref, ssq_ref):
    """z = W @ X on the MXU (bf16 operands, f32 accumulation), with the flattened
    spatial dim lane-dense on the last axis. Also emits per-tile partial sum/sumsq
    (per output channel) so BatchNorm stats stay global under column tiling.
    Padded (out-of-range) input columns are zero, so they contribute 0 to both sums."""
    z = jnp.dot(w_ref[...], x_ref[...], preferred_element_type=jnp.float32)
    y_ref[...] = z
    sum_ref[...] = jnp.sum(z, axis=1, keepdims=True)[None]
    ssq_ref[...] = jnp.sum(z * z, axis=1, keepdims=True)[None]


def _bn_lrelu_kernel(z_ref, sc_ref, sh_ref, o_ref, *, valid_cols, tile):
    """y = LeakyReLU(z * scale + shift); padded columns are zeroed so the output can
    be chained directly into another matmul+stats kernel."""
    y = z_ref[...] * sc_ref[...] + sh_ref[...]
    y = jnp.where(y >= 0, y, SLOPE * y)
    col0 = pl.program_id(0) * tile
    idx = jax.lax.broadcasted_iota(jnp.int32, y.shape, 1) + col0
    o_ref[...] = jnp.where(idx < valid_cols, y, 0.0)


def _bn_lrelu_res_kernel(z_ref, sc_ref, sh_ref, r_ref, o_ref, *, valid_cols, tile):
    """Same as _bn_lrelu_kernel but fuses the FFT-branch residual add."""
    y = z_ref[...] * sc_ref[...] + sh_ref[...]
    y = jnp.where(y >= 0, y, SLOPE * y) + r_ref[...]
    col0 = pl.program_id(0) * tile
    idx = jax.lax.broadcasted_iota(jnp.int32, y.shape, 1) + col0
    o_ref[...] = jnp.where(idx < valid_cols, y, 0.0)


def _bilinear_kernel(ah_ref, x_ref, awt_ref, o_ref):
    """Per-plane bilinear x2 upsample (align_corners=True): o = Ah @ x @ Aw^T."""
    t = jnp.dot(ah_ref[...], x_ref[...], preferred_element_type=jnp.float32)
    o_ref[...] = jnp.dot(t, awt_ref[...], preferred_element_type=jnp.float32)


# ----------------------------------------------------------------------------
# pallas_call wrappers
# ----------------------------------------------------------------------------
def matmul_stats(w, x_cols, valid_cols, tile=COL_TILE):
    """w: (Cout, K) f32, x_cols: (K, cols_pad) f32 with zeros past valid_cols.
    Returns z (Cout, cols_pad) f32, mean (Cout, 1), biased var (Cout, 1)."""
    Cout, K = w.shape
    cols_pad = x_cols.shape[1]
    g = cols_pad // tile
    wb = w.astype(jnp.bfloat16)
    xb = x_cols.astype(jnp.bfloat16)
    z, psum, pssq = pl.pallas_call(
        _matmul_stats_kernel,
        grid=(g,),
        in_specs=[
            pl.BlockSpec((Cout, K), lambda i: (0, 0)),        # weights (broadcast)
            pl.BlockSpec((K, tile), lambda i: (0, i)),        # activation columns (tiled)
        ],
        out_specs=(
            pl.BlockSpec((Cout, tile), lambda i: (0, i)),     # lane-dense output
            pl.BlockSpec((1, Cout, 1), lambda i: (i, 0, 0)),  # per-tile partial sums
            pl.BlockSpec((1, Cout, 1), lambda i: (i, 0, 0)),  # per-tile partial sumsq
        ),
        out_shape=(
            jax.ShapeDtypeStruct((Cout, cols_pad), jnp.float32),
            jax.ShapeDtypeStruct((g, Cout, 1), jnp.float32),
            jax.ShapeDtypeStruct((g, Cout, 1), jnp.float32),
        ),
        compiler_params=_compiler_params(),
        cost_estimate=pl.CostEstimate(
            flops=2 * Cout * K * cols_pad,
            transcendentals=0,
            bytes_accessed=2 * (Cout * K + K * cols_pad) + 4 * Cout * (cols_pad + 2 * g),
        ),
    )(wb, xb)
    n = float(valid_cols)
    mean = jnp.sum(psum, axis=0) / n                              # (Cout, 1)
    var = jnp.maximum(jnp.sum(pssq, axis=0) / n - mean * mean, 0.0)
    return z, mean, var


def bn_lrelu_apply(z, scale, shift, valid_cols, residual=None, tile=COL_TILE):
    """Normalize (precomputed per-channel scale/shift) + LeakyReLU (+residual)."""
    Cout, cols_pad = z.shape
    g = cols_pad // tile
    col_spec = pl.BlockSpec((Cout, tile), lambda i: (0, i))
    vec_spec = pl.BlockSpec((Cout, 1), lambda i: (0, 0))
    if residual is None:
        kernel = partial(_bn_lrelu_kernel, valid_cols=valid_cols, tile=tile)
        in_specs = [col_spec, vec_spec, vec_spec]
        args = (z, scale, shift)
    else:
        kernel = partial(_bn_lrelu_res_kernel, valid_cols=valid_cols, tile=tile)
        in_specs = [col_spec, vec_spec, vec_spec, col_spec]
        args = (z, scale, shift, residual)
    return pl.pallas_call(
        kernel,
        grid=(g,),
        in_specs=in_specs,
        out_specs=col_spec,
        out_shape=jax.ShapeDtypeStruct((Cout, cols_pad), jnp.float32),
        compiler_params=_compiler_params(),
    )(*args)


def interp_matrix(out_size, in_size):
    """Bilinear interpolation matrix (align_corners=True), shape (out_size, in_size)."""
    rows = []
    for i in range(out_size):
        row = [0.0] * in_size
        if out_size == 1 or in_size == 1:
            row[0] = 1.0
        else:
            src = i * (in_size - 1) / (out_size - 1)
            i0 = min(int(math.floor(src)), in_size - 1)
            i1 = min(i0 + 1, in_size - 1)
            frac = src - i0
            row[i0] += 1.0 - frac
            row[i1] += frac
        rows.append(row)
    return jnp.array(rows, dtype=jnp.float32)


def bilinear_upsample_x2(x):
    """x: (N, C, H, W) -> (N, C, 2H, 2W), fused Ah @ x @ Aw^T per plane."""
    N, C, H, W = x.shape
    Ho, Wo = 2 * H, 2 * W
    ah = interp_matrix(Ho, H)                 # (Ho, H)
    awt = interp_matrix(Wo, W).T              # (W, Wo)
    planes = x.reshape(N * C, H, W)
    out = pl.pallas_call(
        _bilinear_kernel,
        grid=(N * C,),
        in_specs=[
            pl.BlockSpec((Ho, H), lambda i: (0, 0)),
            pl.BlockSpec((None, H, W), lambda i: (i, 0, 0)),
            pl.BlockSpec((W, Wo), lambda i: (0, 0)),
        ],
        out_specs=pl.BlockSpec((None, Ho, Wo), lambda i: (i, 0, 0)),
        out_shape=jax.ShapeDtypeStruct((N * C, Ho, Wo), jnp.float32),
        compiler_params=_compiler_params(),
    )(ah, planes, awt)
    return out.reshape(N, C, Ho, Wo)


# ----------------------------------------------------------------------------
# Glue: im2col / column padding, fused conv helpers
# ----------------------------------------------------------------------------
def _im2col_3x3(x_nchw):
    """x: (N, C, H, W) -> (9*C, N*H*W), tap-major / channel-minor rows."""
    N, C, H, W = x_nchw.shape
    xp = jnp.pad(x_nchw, ((0, 0), (0, 0), (1, 1), (1, 1)))
    taps = []
    for ky in range(3):
        for kx in range(3):
            t = xp[:, :, ky:ky + H, kx:kx + W]                       # (N, C, H, W)
            taps.append(t.transpose(1, 0, 2, 3).reshape(C, N * H * W))
    return jnp.concatenate(taps, axis=0)


def _pad_cols(a, cols_pad):
    return jnp.pad(a, ((0, 0), (0, cols_pad - a.shape[1])))


def conv3x3_bn_lrelu(x_nchw, w_oihw, gamma, beta, residual_cols=None, tile=COL_TILE):
    """Conv3x3(pad=1) -> BatchNorm(training batch stats) -> LeakyReLU [-> +residual].
    Returns channel-major (Cout, N*H*W) columns."""
    N, Cin, H, W = x_nchw.shape
    Cout = w_oihw.shape[0]
    cols = N * H * W
    cols_pad = _round_up(cols, tile)
    xcol = _pad_cols(_im2col_3x3(x_nchw), cols_pad)                  # (9Cin, cols_pad)
    wflat = w_oihw.transpose(0, 2, 3, 1).reshape(Cout, 9 * Cin)      # tap-major, ch-minor
    z, mean, var = matmul_stats(wflat, xcol, cols, tile)
    # NOTE: the Conv2d bias cancels exactly under training-mode BatchNorm, so it is folded away.
    scale = gamma * jax.lax.rsqrt(var + EPS)                         # (Cout, 1)
    shift = beta - mean * scale
    res = _pad_cols(residual_cols, cols_pad) if residual_cols is not None else None
    out = bn_lrelu_apply(z, scale, shift, cols, residual=res, tile=tile)
    return out[:, :cols]


def conv1x1_bn_lrelu(x_cols, valid_cols, w, gamma, beta, tile=COL_TILE):
    """Conv1x1 -> BatchNorm(training batch stats) -> LeakyReLU on pre-flattened
    (Cin, cols_pad) columns (padded columns must be zero; output padding is re-zeroed)."""
    z, mean, var = matmul_stats(w, x_cols, valid_cols, tile)
    scale = gamma * jax.lax.rsqrt(var + EPS)
    shift = beta - mean * scale
    return bn_lrelu_apply(z, scale, shift, valid_cols, residual=None, tile=tile)


# ----------------------------------------------------------------------------
# Forward passes
# ----------------------------------------------------------------------------
def double_conv_forward(x, p):
    """x: NCHW (N, Cin, H, W). Returns NCHW (N, Cout, H, W)."""
    N, Cin, H, W = x.shape
    Cmid = p["w1"].shape[0]
    Cout = p["w2"].shape[0]

    # ---- FFT branch (1x1 convs over the rfft2 spectrum) ---------------------
    # TODO(synk): rfft2/irfft2 have no Pallas primitive; computed in plain JAX.
    yc = jnp.fft.rfft2(x, norm="ortho")                       # (N, Cin, H, Wf) complex64
    Wf = yc.shape[-1]
    yf = jnp.concatenate([yc.real, yc.imag], axis=1)          # (N, 2Cin, H, Wf)
    cols_f = N * H * Wf
    cols_f_pad = _round_up(cols_f, COL_TILE)
    yf_cols = _pad_cols(yf.transpose(1, 0, 2, 3).reshape(2 * Cin, cols_f), cols_f_pad)
    hf = conv1x1_bn_lrelu(yf_cols, cols_f, p["wf1"], p["gf1"], p["bef1"])
    zf = conv1x1_bn_lrelu(hf, cols_f, p["wf2"], p["gf2"], p["bef2"])     # (2Cout, cols_f_pad)
    zf = zf[:, :cols_f].reshape(2 * Cout, N, H, Wf).transpose(1, 0, 2, 3)
    zr, zi = jnp.split(zf, 2, axis=1)
    y_space = jnp.fft.irfft2(jax.lax.complex(zr, zi), s=(H, W), norm="ortho")  # (N,Cout,H,W)

    # ---- spatial (main) branch: conv1 has no residual; conv2 fuses + y_space ----
    h1 = conv3x3_bn_lrelu(x, p["w1"], p["g1"], p["be1"])                 # (Cmid, NHW)
    h1_nchw = h1.reshape(Cmid, N, H, W).transpose(1, 0, 2, 3)
    res_cols = y_space.transpose(1, 0, 2, 3).reshape(Cout, N * H * W)
    out = conv3x3_bn_lrelu(h1_nchw, p["w2"], p["g2"], p["be2"], residual_cols=res_cols)
    return out.reshape(Cout, N, H, W).transpose(1, 0, 2, 3)              # NCHW


def up_forward(x1, x2, p):
    """x1: NCHW deep features, x2: NCHW skip features."""
    N, C1, H1, W1 = x1.shape
    _, C2, H2, W2 = x2.shape
    u = bilinear_upsample_x2(x1)                                         # (N, C1, 2H1, 2W1)
    Ho, Wo = 2 * H1, 2 * W1
    diffY = H2 - Ho
    diffX = W2 - Wo
    u = jnp.pad(u, ((0, 0), (0, 0),
                    (diffY // 2, diffY - diffY // 2),
                    (diffX // 2, diffX - diffX // 2)))
    x = jnp.concatenate([x2, u], axis=1)                                 # (N, C2 + C1, H2, W2)
    return double_conv_forward(x, p)


# ----------------------------------------------------------------------------
# Deterministic synthetic parameters (DoubleConv(in_ch, out_ch, in_ch // 2))
# Conv biases are omitted: with BatchNorm in training mode (batch statistics) a
# per-channel conv bias cancels exactly in the normalized output.
# ----------------------------------------------------------------------------
def init_params(key, in_ch, out_ch, mid_ch):
    ks = jax.random.split(key, 4)

    def conv_w(k, co, ci, kh, kw):
        fan = ci * kh * kw
        return jax.random.normal(k, (co, ci, kh, kw), jnp.float32) / math.sqrt(fan)

    return {
        # main: Conv3x3(in->mid), BN(mid), Conv3x3(mid->out), BN(out)
        "w1": conv_w(ks[0], mid_ch, in_ch, 3, 3),
        "g1": jnp.ones((mid_ch, 1), jnp.float32), "be1": jnp.zeros((mid_ch, 1), jnp.float32),
        "w2": conv_w(ks[1], out_ch, mid_ch, 3, 3),
        "g2": jnp.ones((out_ch, 1), jnp.float32), "be2": jnp.zeros((out_ch, 1), jnp.float32),
        # main_fft: Conv1x1(2in->2mid), BN, Conv1x1(2mid->2out), BN
        "wf1": conv_w(ks[2], 2 * mid_ch, 2 * in_ch, 1, 1)[:, :, 0, 0],
        "gf1": jnp.ones((2 * mid_ch, 1), jnp.float32), "bef1": jnp.zeros((2 * mid_ch, 1), jnp.float32),
        "wf2": conv_w(ks[3], 2 * out_ch, 2 * mid_ch, 1, 1)[:, :, 0, 0],
        "gf2": jnp.ones((2 * out_ch, 1), jnp.float32), "bef2": jnp.zeros((2 * out_ch, 1), jnp.float32),
    }


if __name__ == "__main__":
    key = jax.random.PRNGKey(0)
    k1, k2, kp = jax.random.split(key, 3)

    in_channels, out_channels = 8, 4          # Up(in_channels=8, out_channels=4, bilinear=True)
    # Standard UNet convention: x1 (deep) and x2 (skip) each carry in_channels//2 channels.
    x1 = jax.random.normal(k1, (2, in_channels // 2, 8, 8), jnp.float32)    # deep feature map
    x2 = jax.random.normal(k2, (2, in_channels // 2, 16, 16), jnp.float32)  # skip connection

    params = init_params(kp, in_channels, out_channels, in_channels // 2)

    out = jax.jit(up_forward)(x1, x2, params)
    out = jax.block_until_ready(out)

    assert out.shape == (2, out_channels, 16, 16), out.shape
    assert bool(jnp.all(jnp.isfinite(out)))
    print("KERNEL_OK")
</pallas_src>

<mosaic_0001>
module attributes {stable_mosaic.version = 11 : i64} {
  func.func @_bilinear_kernel(%arg0: i32, %arg1: memref<16x8xf32, #tpu.memory_space<vmem>>, %arg2: memref<1x8x8xf32, #tpu.memory_space<vmem>>, %arg3: memref<8x16xf32, #tpu.memory_space<vmem>>, %arg4: memref<1x16x16xf32, #tpu.memory_space<vmem>>) attributes {dimension_semantics = [#tpu.dimension_semantics<parallel>], iteration_bounds = array<i64: 8>, scalar_prefetch = 0 : i64, scratch_operands = 0 : i64, tpu.core_type = #tpu.core_type<tc>, window_params = [{pipeline_mode = #tpu.pipeline_mode<synchronous>, transform_indices = @transform_0, window_bounds = array<i64: 16, 8>}, {transform_indices = @transform_1, window_bounds = array<i64: 1, 8, 8>}, {pipeline_mode = #tpu.pipeline_mode<synchronous>, transform_indices = @transform_2, window_bounds = array<i64: 8, 16>}, {transform_indices = @transform_3, window_bounds = array<i64: 1, 16, 16>}]} {
    %c0 = arith.constant 0 : index
    %c0_0 = arith.constant 0 : index
    %0 = vector.load %arg1[%c0, %c0_0] : memref<16x8xf32, #tpu.memory_space<vmem>>, vector<16x8xf32>
    %c0_1 = arith.constant 0 : index
    %c0_2 = arith.constant 0 : index
    %c0_3 = arith.constant 0 : index
    %1 = vector.load %arg2[%c0_1, %c0_2, %c0_3] : memref<1x8x8xf32, #tpu.memory_space<vmem>>, vector<1x8x8xf32>
    %2 = vector.shape_cast %1 : vector<1x8x8xf32> to vector<8x8xf32>
    %cst = arith.constant dense<0.000000e+00> : vector<16x8xf32>
    %3 = tpu.matmul %0, %2, %cst {dimension_numbers = #tpu.dot_dimension_numbers<[1], [0], [0], [1], [0, 0, 1, 1], [], []>} : vector<16x8xf32>, vector<8x8xf32>, vector<16x8xf32> -> vector<16x8xf32>
    %c0_4 = arith.constant 0 : index
    %c0_5 = arith.constant 0 : index
    %4 = vector.load %arg3[%c0_4, %c0_5] : memref<8x16xf32, #tpu.memory_space<vmem>>, vector<8x16xf32>
    %cst_6 = arith.constant dense<0.000000e+00> : vector<16x16xf32>
    %5 = tpu.matmul %3, %4, %cst_6 {dimension_numbers = #tpu.dot_dimension_numbers<[1], [0], [0], [1], [0, 0, 1, 1], [], []>} : vector<16x8xf32>, vector<8x16xf32>, vector<16x16xf32> -> vector<16x16xf32>
    %c0_7 = arith.constant 0 : index
    %c0_8 = arith.constant 0 : index
    %c0_9 = arith.constant 0 : index
    %6 = vector.load %arg4[%c0_7, %c0_8, %c0_9] : memref<1x16x16xf32, #tpu.memory_space<vmem>>, vector<1x16x16xf32>
    %7 = vector.shape_cast %6 : vector<1x16x16xf32> to vector<16x16xf32>
    %8 = vector.shape_cast %5 : vector<16x16xf32> to vector<1x16x16xf32>
    tpu.vector_store %arg4[%c0_7, %c0_8, %c0_9], %8 {strides = array<i32>} : memref<1x16x16xf32, #tpu.memory_space<vmem>>, vector<1x16x16xf32>,
    return
  }
  func.func @transform_0(%arg0: i32) -> (i32, i32) {
    %c0_i32 = arith.constant 0 : i32
    %c0_i32_0 = arith.constant 0 : i32
    %c0_i32_1 = arith.constant 0 : i32
    return %c0_i32, %c0_i32_0 : i32, i32
  }
  func.func @transform_1(%arg0: i32) -> (i32, i32, i32) {
    %c0_i32 = arith.constant 0 : i32
    %c0_i32_0 = arith.constant 0 : i32
    %c0_i32_1 = arith.constant 0 : i32
    return %arg0, %c0_i32, %c0_i32_0 : i32, i32, i32
  }
  func.func @transform_2(%arg0: i32) -> (i32, i32) {
    %c0_i32 = arith.constant 0 : i32
    %c0_i32_0 = arith.constant 0 : i32
    %c0_i32_1 = arith.constant 0 : i32
    return %c0_i32, %c0_i32_0 : i32, i32
  }
  func.func @transform_3(%arg0: i32) -> (i32, i32, i32) {
    %c0_i32 = arith.constant 0 : i32
    %c0_i32_0 = arith.constant 0 : i32
    %c0_i32_1 = arith.constant 0 : i32
    return %arg0, %c0_i32, %c0_i32_0 : i32, i32, i32
  }
}

module attributes {stable_mosaic.version = 11 : i64} {
  func.func @_matmul_stats_kernel(%arg0: i32, %arg1: memref<8x16xbf16, #tpu.memory_space<vmem>>, %arg2: memref<16x512xbf16, #tpu.memory_space<vmem>>, %arg3: memref<8x512xf32, #tpu.memory_space<vmem>>, %arg4: memref<1x8x1xf32, #tpu.memory_space<vmem>>, %arg5: memref<1x8x1xf32, #tpu.memory_space<vmem>>) attributes {dimension_semantics = [#tpu.dimension_semantics<parallel>], iteration_bounds = array<i64: 1>, scalar_prefetch = 0 : i64, scratch_operands = 0 : i64, tpu.core_type = #tpu.core_type<tc>, window_params = [{pipeline_mode = #tpu.pipeline_mode<synchronous>, transform_indices = @transform_0, window_bounds = array<i64: 8, 16>}, {transform_indices = @transform_1, window_bounds = array<i64: 16, 512>}, {transform_indices = @transform_2, window_bounds = array<i64: 8, 512>}, {transform_indices = @transform_3, window_bounds = array<i64: 1, 8, 1>}, {transform_indices = @transform_4, window_bounds = array<i64: 1, 8, 1>}]} {
    %c0 = arith.constant 0 : index
    %c0_0 = arith.constant 0 : index
    %0 = vector.load %arg1[%c0, %c0_0] : memref<8x16xbf16, #tpu.memory_space<vmem>>, vector<8x16xbf16>
    %c0_1 = arith.constant 0 : index
    %c0_2 = arith.constant 0 : index
    %1 = vector.load %arg2[%c0_1, %c0_2] : memref<16x512xbf16, #tpu.memory_space<vmem>>, vector<16x512xbf16>
    %cst = arith.constant dense<0.000000e+00> : vector<8x512xf32>
    %2 = tpu.matmul %0, %1, %cst {dimension_numbers = #tpu.dot_dimension_numbers<[1], [0], [0], [1], [0, 0, 1, 1], [], []>} : vector<8x16xbf16>, vector<16x512xbf16>, vector<8x512xf32> -> vector<8x512xf32>
    %c0_3 = arith.constant 0 : index
    %c0_4 = arith.constant 0 : index
    %3 = vector.load %arg3[%c0_3, %c0_4] : memref<8x512xf32, #tpu.memory_space<vmem>>, vector<8x512xf32>
    tpu.vector_store %arg3[%c0_3, %c0_4], %2 {strides = array<i32>} : memref<8x512xf32, #tpu.memory_space<vmem>>, vector<8x512xf32>,
    %cst_5 = arith.constant dense<0.000000e+00> : vector<8xf32>
    %4 = vector.multi_reduction <add>, %2, %cst_5 [1] : vector<8x512xf32> to vector<8xf32>
    %5 = vector.shape_cast %4 : vector<8xf32> to vector<8x1xf32>
    %6 = vector.shape_cast %5 : vector<8x1xf32> to vector<1x8x1xf32>
    %c0_6 = arith.constant 0 : index
    %c0_7 = arith.constant 0 : index
    %c0_8 = arith.constant 0 : index
    %7 = vector.load %arg4[%c0_6, %c0_7, %c0_8] : memref<1x8x1xf32, #tpu.memory_space<vmem>>, vector<1x8x1xf32>
    tpu.vector_store %arg4[%c0_6, %c0_7, %c0_8], %6 {strides = array<i32>} : memref<1x8x1xf32, #tpu.memory_space<vmem>>, vector<1x8x1xf32>,
    %8 = arith.mulf %2, %2 : vector<8x512xf32>
    %cst_9 = arith.constant dense<0.000000e+00> : vector<8xf32>
    %9 = vector.multi_reduction <add>, %8, %cst_9 [1] : vector<8x512xf32> to vector<8xf32>
    %10 = vector.shape_cast %9 : vector<8xf32> to vector<8x1xf32>
    %11 = vector.shape_cast %10 : vector<8x1xf32> to vector<1x8x1xf32>
    %c0_10 = arith.constant 0 : index
    %c0_11 = arith.constant 0 : index
    %c0_12 = arith.constant 0 : index
    %12 = vector.load %arg5[%c0_10, %c0_11, %c0_12] : memref<1x8x1xf32, #tpu.memory_space<vmem>>, vector<1x8x1xf32>
    tpu.vector_store %arg5[%c0_10, %c0_11, %c0_12], %11 {strides = array<i32>} : memref<1x8x1xf32, #tpu.memory_space<vmem>>, vector<1x8x1xf32>,
    return
  }
  func.func @transform_0(%arg0: i32) -> (i32, i32) {
    %c0_i32 = arith.constant 0 : i32
    %c0_i32_0 = arith.constant 0 : i32
    %c0_i32_1 = arith.constant 0 : i32
    return %c0_i32, %c0_i32_0 : i32, i32
  }
  func.func @transform_1(%arg0: i32) -> (i32, i32) {
    %c0_i32 = arith.constant 0 : i32
    %c0_i32_0 = arith.constant 0 : i32
    return %c0_i32, %arg0 : i32, i32
  }
  func.func @transform_2(%arg0: i32) -> (i32, i32) {
    %c0_i32 = arith.constant 0 : i32
    %c0_i32_0 = arith.constant 0 : i32
    return %c0_i32, %arg0 : i32, i32
  }
  func.func @transform_3(%arg0: i32) -> (i32, i32, i32) {
    %c0_i32 = arith.constant 0 : i32
    %c0_i32_0 = arith.constant 0 : i32
    %c0_i32_1 = arith.constant 0 : i32
    return %arg0, %c0_i32, %c0_i32_0 : i32, i32, i32
  }
  func.func @transform_4(%arg0: i32) -> (i32, i32, i32) {
    %c0_i32 = arith.constant 0 : i32
    %c0_i32_0 = arith.constant 0 : i32
    %c0_i32_1 = arith.constant 0 : i32
    return %arg0, %c0_i32, %c0_i32_0 : i32, i32, i32
  }
}

module attributes {stable_mosaic.version = 11 : i64} {
  func.func @_bn_lrelu_kernel(%arg0: i32, %arg1: memref<8x512xf32, #tpu.memory_space<vmem>>, %arg2: memref<8x1xf32, #tpu.memory_space<vmem>>, %arg3: memref<8x1xf32, #tpu.memory_space<vmem>>, %arg4: memref<8x512xf32, #tpu.memory_space<vmem>>) attributes {dimension_semantics = [#tpu.dimension_semantics<parallel>], iteration_bounds = array<i64: 1>, scalar_prefetch = 0 : i64, scratch_operands = 0 : i64, tpu.core_type = #tpu.core_type<tc>, window_params = [{transform_indices = @transform_0, window_bounds = array<i64: 8, 512>}, {pipeline_mode = #tpu.pipeline_mode<synchronous>, transform_indices = @transform_1, window_bounds = array<i64: 8, 1>}, {pipeline_mode = #tpu.pipeline_mode<synchronous>, transform_indices = @transform_2, window_bounds = array<i64: 8, 1>}, {transform_indices = @transform_3, window_bounds = array<i64: 8, 512>}]} {
    %c0 = arith.constant 0 : index
    %c0_0 = arith.constant 0 : index
    %0 = vector.load %arg1[%c0, %c0_0] : memref<8x512xf32, #tpu.memory_space<vmem>>, vector<8x512xf32>
    %c0_1 = arith.constant 0 : index
    %c0_2 = arith.constant 0 : index
    %1 = vector.load %arg2[%c0_1, %c0_2] : memref<8x1xf32, #tpu.memory_space<vmem>>, vector<8x1xf32>
    %2 = vector.broadcast %1 : vector<8x1xf32> to vector<8x512xf32>
    %3 = arith.mulf %0, %2 : vector<8x512xf32>
    %c0_3 = arith.constant 0 : index
    %c0_4 = arith.constant 0 : index
    %4 = vector.load %arg3[%c0_3, %c0_4] : memref<8x1xf32, #tpu.memory_space<vmem>>, vector<8x1xf32>
    %5 = vector.broadcast %4 : vector<8x1xf32> to vector<8x512xf32>
    %6 = arith.addf %3, %5 : vector<8x512xf32>
    %cst = arith.constant 0.000000e+00 : f32
    %7 = vector.broadcast %cst : f32 to vector<8x512xf32>
    %8 = arith.cmpf oge, %6, %7 : vector<8x512xf32>
    %cst_5 = arith.constant 0.00999999977 : f32
    %9 = vector.broadcast %cst_5 : f32 to vector<8x512xf32>
    %10 = arith.mulf %9, %6 : vector<8x512xf32>
    %11 = arith.select %8, %6, %10 : vector<8x512xi1>, vector<8x512xf32>
    %c512_i32 = arith.constant 512 : i32
    %12 = arith.muli %arg0, %c512_i32 : i32
    %13 = tpu.iota {dimensions = array<i32: 1>} : vector<8x512xi32>
    %14 = vector.broadcast %12 : i32 to vector<8x512xi32>
    %15 = arith.addi %13, %14 : vector<8x512xi32>
    %c288_i32 = arith.constant 288 : i32
    %16 = vector.broadcast %c288_i32 : i32 to vector<8x512xi32>
    %17 = arith.cmpi slt, %15, %16 : vector<8x512xi32>
    %cst_6 = arith.constant 0.000000e+00 : f32
    %18 = vector.broadcast %cst_6 : f32 to vector<8x512xf32>
    %19 = arith.select %17, %11, %18 : vector<8x512xi1>, vector<8x512xf32>
    %c0_7 = arith.constant 0 : index
    %c0_8 = arith.constant 0 : index
    %20 = vector.load %arg4[%c0_7, %c0_8] : memref<8x512xf32, #tpu.memory_space<vmem>>, vector<8x512xf32>
    tpu.vector_store %arg4[%c0_7, %c0_8], %19 {strides = array<i32>} : memref<8x512xf32, #tpu.memory_space<vmem>>, vector<8x512xf32>,
    return
  }
  func.func @transform_0(%arg0: i32) -> (i32, i32) {
    %c0_i32 = arith.constant 0 : i32
    %c0_i32_0 = arith.constant 0 : i32
    return %c0_i32, %arg0 : i32, i32
  }
  func.func @transform_1(%arg0: i32) -> (i32, i32) {
    %c0_i32 = arith.constant 0 : i32
    %c0_i32_0 = arith.constant 0 : i32
    %c0_i32_1 = arith.constant 0 : i32
    return %c0_i32, %c0_i32_0 : i32, i32
  }
  func.func @transform_2(%arg0: i32) -> (i32, i32) {
    %c0_i32 = arith.constant 0 : i32
    %c0_i32_0 = arith.constant 0 : i32
    %c0_i32_1 = arith.constant 0 : i32
    return %c0_i32, %c0_i32_0 : i32, i32
  }
  func.func @transform_3(%arg0: i32) -> (i32, i32) {
    %c0_i32 = arith.constant 0 : i32
    %c0_i32_0 = arith.constant 0 : i32
    return %c0_i32, %arg0 : i32, i32
  }
}

module attributes {stable_mosaic.version = 11 : i64} {
  func.func @_matmul_stats_kernel(%arg0: i32, %arg1: memref<8x8xbf16, #tpu.memory_space<vmem>>, %arg2: memref<8x512xbf16, #tpu.memory_space<vmem>>, %arg3: memref<8x512xf32, #tpu.memory_space<vmem>>, %arg4: memref<1x8x1xf32, #tpu.memory_space<vmem>>, %arg5: memref<1x8x1xf32, #tpu.memory_space<vmem>>) attributes {dimension_semantics = [#tpu.dimension_semantics<parallel>], iteration_bounds = array<i64: 1>, scalar_prefetch = 0 : i64, scratch_operands = 0 : i64, tpu.core_type = #tpu.core_type<tc>, window_params = [{pipeline_mode = #tpu.pipeline_mode<synchronous>, transform_indices = @transform_0, window_bounds = array<i64: 8, 8>}, {transform_indices = @transform_1, window_bounds = array<i64: 8, 512>}, {transform_indices = @transform_2, window_bounds = array<i64: 8, 512>}, {transform_indices = @transform_3, window_bounds = array<i64: 1, 8, 1>}, {transform_indices = @transform_4, window_bounds = array<i64: 1, 8, 1>}]} {
    %c0 = arith.constant 0 : index
    %c0_0 = arith.constant 0 : index
    %0 = vector.load %arg1[%c0, %c0_0] : memref<8x8xbf16, #tpu.memory_space<vmem>>, vector<8x8xbf16>
    %c0_1 = arith.constant 0 : index
    %c0_2 = arith.constant 0 : index
    %1 = vector.load %arg2[%c0_1, %c0_2] : memref<8x512xbf16, #tpu.memory_space<vmem>>, vector<8x512xbf16>
    %cst = arith.constant dense<0.000000e+00> : vector<8x512xf32>
    %2 = tpu.matmul %0, %1, %cst {dimension_numbers = #tpu.dot_dimension_numbers<[1], [0], [0], [1], [0, 0, 1, 1], [], []>} : vector<8x8xbf16>, vector<8x512xbf16>, vector<8x512xf32> -> vector<8x512xf32>
    %c0_3 = arith.constant 0 : index
    %c0_4 = arith.constant 0 : index
    %3 = vector.load %arg3[%c0_3, %c0_4] : memref<8x512xf32, #tpu.memory_space<vmem>>, vector<8x512xf32>
    tpu.vector_store %arg3[%c0_3, %c0_4], %2 {strides = array<i32>} : memref<8x512xf32, #tpu.memory_space<vmem>>, vector<8x512xf32>,
    %cst_5 = arith.constant dense<0.000000e+00> : vector<8xf32>
    %4 = vector.multi_reduction <add>, %2, %cst_5 [1] : vector<8x512xf32> to vector<8xf32>
    %5 = vector.shape_cast %4 : vector<8xf32> to vector<8x1xf32>
    %6 = vector.shape_cast %5 : vector<8x1xf32> to vector<1x8x1xf32>
    %c0_6 = arith.constant 0 : index
    %c0_7 = arith.constant 0 : index
    %c0_8 = arith.constant 0 : index
    %7 = vector.load %arg4[%c0_6, %c0_7, %c0_8] : memref<1x8x1xf32, #tpu.memory_space<vmem>>, vector<1x8x1xf32>
    tpu.vector_store %arg4[%c0_6, %c0_7, %c0_8], %6 {strides = array<i32>} : memref<1x8x1xf32, #tpu.memory_space<vmem>>, vector<1x8x1xf32>,
    %8 = arith.mulf %2, %2 : vector<8x512xf32>
    %cst_9 = arith.constant dense<0.000000e+00> : vector<8xf32>
    %9 = vector.multi_reduction <add>, %8, %cst_9 [1] : vector<8x512xf32> to vector<8xf32>
    %10 = vector.shape_cast %9 : vector<8xf32> to vector<8x1xf32>
    %11 = vector.shape_cast %10 : vector<8x1xf32> to vector<1x8x1xf32>
    %c0_10 = arith.constant 0 : index
    %c0_11 = arith.constant 0 : index
    %c0_12 = arith.constant 0 : index
    %12 = vector.load %arg5[%c0_10, %c0_11, %c0_12] : memref<1x8x1xf32, #tpu.memory_space<vmem>>, vector<1x8x1xf32>
    tpu.vector_store %arg5[%c0_10, %c0_11, %c0_12], %11 {strides = array<i32>} : memref<1x8x1xf32, #tpu.memory_space<vmem>>, vector<1x8x1xf32>,
    return
  }
  func.func @transform_0(%arg0: i32) -> (i32, i32) {
    %c0_i32 = arith.constant 0 : i32
    %c0_i32_0 = arith.constant 0 : i32
    %c0_i32_1 = arith.constant 0 : i32
    return %c0_i32, %c0_i32_0 : i32, i32
  }
  func.func @transform_1(%arg0: i32) -> (i32, i32) {
    %c0_i32 = arith.constant 0 : i32
    %c0_i32_0 = arith.constant 0 : i32
    return %c0_i32, %arg0 : i32, i32
  }
  func.func @transform_2(%arg0: i32) -> (i32, i32) {
    %c0_i32 = arith.constant 0 : i32
    %c0_i32_0 = arith.constant 0 : i32
    return %c0_i32, %arg0 : i32, i32
  }
  func.func @transform_3(%arg0: i32) -> (i32, i32, i32) {
    %c0_i32 = arith.constant 0 : i32
    %c0_i32_0 = arith.constant 0 : i32
    %c0_i32_1 = arith.constant 0 : i32
    return %arg0, %c0_i32, %c0_i32_0 : i32, i32, i32
  }
  func.func @transform_4(%arg0: i32) -> (i32, i32, i32) {
    %c0_i32 = arith.constant 0 : i32
    %c0_i32_0 = arith.constant 0 : i32
    %c0_i32_1 = arith.constant 0 : i32
    return %arg0, %c0_i32, %c0_i32_0 : i32, i32, i32
  }
}

module attributes {stable_mosaic.version = 11 : i64} {
  func.func @_matmul_stats_kernel(%arg0: i32, %arg1: memref<4x72xbf16, #tpu.memory_space<vmem>>, %arg2: memref<72x512xbf16, #tpu.memory_space<vmem>>, %arg3: memref<4x512xf32, #tpu.memory_space<vmem>>, %arg4: memref<1x4x1xf32, #tpu.memory_space<vmem>>, %arg5: memref<1x4x1xf32, #tpu.memory_space<vmem>>) attributes {dimension_semantics = [#tpu.dimension_semantics<parallel>], iteration_bounds = array<i64: 1>, scalar_prefetch = 0 : i64, scratch_operands = 0 : i64, tpu.core_type = #tpu.core_type<tc>, window_params = [{pipeline_mode = #tpu.pipeline_mode<synchronous>, transform_indices = @transform_0, window_bounds = array<i64: 4, 72>}, {transform_indices = @transform_1, window_bounds = array<i64: 72, 512>}, {transform_indices = @transform_2, window_bounds = array<i64: 4, 512>}, {transform_indices = @transform_3, window_bounds = array<i64: 1, 4, 1>}, {transform_indices = @transform_4, window_bounds = array<i64: 1, 4, 1>}]} {
    %c0 = arith.constant 0 : index
    %c0_0 = arith.constant 0 : index
    %0 = vector.load %arg1[%c0, %c0_0] : memref<4x72xbf16, #tpu.memory_space<vmem>>, vector<4x72xbf16>
    %c0_1 = arith.constant 0 : index
    %c0_2 = arith.constant 0 : index
    %1 = vector.load %arg2[%c0_1, %c0_2] : memref<72x512xbf16, #tpu.memory_space<vmem>>, vector<72x512xbf16>
    %cst = arith.constant dense<0.000000e+00> : vector<4x512xf32>
    %2 = tpu.matmul %0, %1, %cst {dimension_numbers = #tpu.dot_dimension_numbers<[1], [0], [0], [1], [0, 0, 1, 1], [], []>} : vector<4x72xbf16>, vector<72x512xbf16>, vector<4x512xf32> -> vector<4x512xf32>
    %c0_3 = arith.constant 0 : index
    %c0_4 = arith.constant 0 : index
    %3 = vector.load %arg3[%c0_3, %c0_4] : memref<4x512xf32, #tpu.memory_space<vmem>>, vector<4x512xf32>
    tpu.vector_store %arg3[%c0_3, %c0_4], %2 {strides = array<i32>} : memref<4x512xf32, #tpu.memory_space<vmem>>, vector<4x512xf32>,
    %cst_5 = arith.constant dense<0.000000e+00> : vector<4xf32>
    %4 = vector.multi_reduction <add>, %2, %cst_5 [1] : vector<4x512xf32> to vector<4xf32>
    %5 = vector.shape_cast %4 : vector<4xf32> to vector<4x1xf32>
    %6 = vector.shape_cast %5 : vector<4x1xf32> to vector<1x4x1xf32>
    %c0_6 = arith.constant 0 : index
    %c0_7 = arith.constant 0 : index
    %c0_8 = arith.constant 0 : index
    %7 = vector.load %arg4[%c0_6, %c0_7, %c0_8] : memref<1x4x1xf32, #tpu.memory_space<vmem>>, vector<1x4x1xf32>
    tpu.vector_store %arg4[%c0_6, %c0_7, %c0_8], %6 {strides = array<i32>} : memref<1x4x1xf32, #tpu.memory_space<vmem>>, vector<1x4x1xf32>,
    %8 = arith.mulf %2, %2 : vector<4x512xf32>
    %cst_9 = arith.constant dense<0.000000e+00> : vector<4xf32>
    %9 = vector.multi_reduction <add>, %8, %cst_9 [1] : vector<4x512xf32> to vector<4xf32>
    %10 = vector.shape_cast %9 : vector<4xf32> to vector<4x1xf32>
    %11 = vector.shape_cast %10 : vector<4x1xf32> to vector<1x4x1xf32>
    %c0_10 = arith.constant 0 : index
    %c0_11 = arith.constant 0 : index
    %c0_12 = arith.constant 0 : index
    %12 = vector.load %arg5[%c0_10, %c0_11, %c0_12] : memref<1x4x1xf32, #tpu.memory_space<vmem>>, vector<1x4x1xf32>
    tpu.vector_store %arg5[%c0_10, %c0_11, %c0_12], %11 {strides = array<i32>} : memref<1x4x1xf32, #tpu.memory_space<vmem>>, vector<1x4x1xf32>,
    return
  }
  func.func @transform_0(%arg0: i32) -> (i32, i32) {
    %c0_i32 = arith.constant 0 : i32
    %c0_i32_0 = arith.constant 0 : i32
    %c0_i32_1 = arith.constant 0 : i32
    return %c0_i32, %c0_i32_0 : i32, i32
  }
  func.func @transform_1(%arg0: i32) -> (i32, i32) {
    %c0_i32 = arith.constant 0 : i32
    %c0_i32_0 = arith.constant 0 : i32
    return %c0_i32, %arg0 : i32, i32
  }
  func.func @transform_2(%arg0: i32) -> (i32, i32) {
    %c0_i32 = arith.constant 0 : i32
    %c0_i32_0 = arith.constant 0 : i32
    return %c0_i32, %arg0 : i32, i32
  }
  func.func @transform_3(%arg0: i32) -> (i32, i32, i32) {
    %c0_i32 = arith.constant 0 : i32
    %c0_i32_0 = arith.constant 0 : i32
    %c0_i32_1 = arith.constant 0 : i32
    return %arg0, %c0_i32, %c0_i32_0 : i32, i32, i32
  }
  func.func @transform_4(%arg0: i32) -> (i32, i32, i32) {
    %c0_i32 = arith.constant 0 : i32
    %c0_i32_0 = arith.constant 0 : i32
    %c0_i32_1 = arith.constant 0 : i32
    return %arg0, %c0_i32, %c0_i32_0 : i32, i32, i32
  }
}

module attributes {stable_mosaic.version = 11 : i64} {
  func.func @_bn_lrelu_kernel(%arg0: i32, %arg1: memref<4x512xf32, #tpu.memory_space<vmem>>, %arg2: memref<4x1xf32, #tpu.memory_space<vmem>>, %arg3: memref<4x1xf32, #tpu.memory_space<vmem>>, %arg4: memref<4x512xf32, #tpu.memory_space<vmem>>) attributes {dimension_semantics = [#tpu.dimension_semantics<parallel>], iteration_bounds = array<i64: 1>, scalar_prefetch = 0 : i64, scratch_operands = 0 : i64, tpu.core_type = #tpu.core_type<tc>, window_params = [{transform_indices = @transform_0, window_bounds = array<i64: 4, 512>}, {pipeline_mode = #tpu.pipeline_mode<synchronous>, transform_indices = @transform_1, window_bounds = array<i64: 4, 1>}, {pipeline_mode = #tpu.pipeline_mode<synchronous>, transform_indices = @transform_2, window_bounds = array<i64: 4, 1>}, {transform_indices = @transform_3, window_bounds = array<i64: 4, 512>}]} {
    %c0 = arith.constant 0 : index
    %c0_0 = arith.constant 0 : index
    %0 = vector.load %arg1[%c0, %c0_0] : memref<4x512xf32, #tpu.memory_space<vmem>>, vector<4x512xf32>
    %c0_1 = arith.constant 0 : index
    %c0_2 = arith.constant 0 : index
    %1 = vector.load %arg2[%c0_1, %c0_2] : memref<4x1xf32, #tpu.memory_space<vmem>>, vector<4x1xf32>
    %2 = vector.broadcast %1 : vector<4x1xf32> to vector<4x512xf32>
    %3 = arith.mulf %0, %2 : vector<4x512xf32>
    %c0_3 = arith.constant 0 : index
    %c0_4 = arith.constant 0 : index
    %4 = vector.load %arg3[%c0_3, %c0_4] : memref<4x1xf32, #tpu.memory_space<vmem>>, vector<4x1xf32>
    %5 = vector.broadcast %4 : vector<4x1xf32> to vector<4x512xf32>
    %6 = arith.addf %3, %5 : vector<4x512xf32>
    %cst = arith.constant 0.000000e+00 : f32
    %7 = vector.broadcast %cst : f32 to vector<4x512xf32>
    %8 = arith.cmpf oge, %6, %7 : vector<4x512xf32>
    %cst_5 = arith.constant 0.00999999977 : f32
    %9 = vector.broadcast %cst_5 : f32 to vector<4x512xf32>
    %10 = arith.mulf %9, %6 : vector<4x512xf32>
    %11 = arith.select %8, %6, %10 : vector<4x512xi1>, vector<4x512xf32>
    %c512_i32 = arith.constant 512 : i32
    %12 = arith.muli %arg0, %c512_i32 : i32
    %13 = tpu.iota {dimensions = array<i32: 1>} : vector<4x512xi32>
    %14 = vector.broadcast %12 : i32 to vector<4x512xi32>
    %15 = arith.addi %13, %14 : vector<4x512xi32>
    %c512_i32_6 = arith.constant 512 : i32
    %16 = vector.broadcast %c512_i32_6 : i32 to vector<4x512xi32>
    %17 = arith.cmpi slt, %15, %16 : vector<4x512xi32>
    %cst_7 = arith.constant 0.000000e+00 : f32
    %18 = vector.broadcast %cst_7 : f32 to vector<4x512xf32>
    %19 = arith.select %17, %11, %18 : vector<4x512xi1>, vector<4x512xf32>
    %c0_8 = arith.constant 0 : index
    %c0_9 = arith.constant 0 : index
    %20 = vector.load %arg4[%c0_8, %c0_9] : memref<4x512xf32, #tpu.memory_space<vmem>>, vector<4x512xf32>
    tpu.vector_store %arg4[%c0_8, %c0_9], %19 {strides = array<i32>} : memref<4x512xf32, #tpu.memory_space<vmem>>, vector<4x512xf32>,
    return
  }
  func.func @transform_0(%arg0: i32) -> (i32, i32) {
    %c0_i32 = arith.constant 0 : i32
    %c0_i32_0 = arith.constant 0 : i32
    return %c0_i32, %arg0 : i32, i32
  }
  func.func @transform_1(%arg0: i32) -> (i32, i32) {
    %c0_i32 = arith.constant 0 : i32
    %c0_i32_0 = arith.constant 0 : i32
    %c0_i32_1 = arith.constant 0 : i32
    return %c0_i32, %c0_i32_0 : i32, i32
  }
  func.func @transform_2(%arg0: i32) -> (i32, i32) {
    %c0_i32 = arith.constant 0 : i32
    %c0_i32_0 = arith.constant 0 : i32
    %c0_i32_1 = arith.constant 0 : i32
    return %c0_i32, %c0_i32_0 : i32, i32
  }
  func.func @transform_3(%arg0: i32) -> (i32, i32) {
    %c0_i32 = arith.constant 0 : i32
    %c0_i32_0 = arith.constant 0 : i32
    return %c0_i32, %arg0 : i32, i32
  }
}

module attributes {stable_mosaic.version = 11 : i64} {
  func.func @_matmul_stats_kernel(%arg0: i32, %arg1: memref<4x36xbf16, #tpu.memory_space<vmem>>, %arg2: memref<36x512xbf16, #tpu.memory_space<vmem>>, %arg3: memref<4x512xf32, #tpu.memory_space<vmem>>, %arg4: memref<1x4x1xf32, #tpu.memory_space<vmem>>, %arg5: memref<1x4x1xf32, #tpu.memory_space<vmem>>) attributes {dimension_semantics = [#tpu.dimension_semantics<parallel>], iteration_bounds = array<i64: 1>, scalar_prefetch = 0 : i64, scratch_operands = 0 : i64, tpu.core_type = #tpu.core_type<tc>, window_params = [{pipeline_mode = #tpu.pipeline_mode<synchronous>, transform_indices = @transform_0, window_bounds = array<i64: 4, 36>}, {transform_indices = @transform_1, window_bounds = array<i64: 36, 512>}, {transform_indices = @transform_2, window_bounds = array<i64: 4, 512>}, {transform_indices = @transform_3, window_bounds = array<i64: 1, 4, 1>}, {transform_indices = @transform_4, window_bounds = array<i64: 1, 4, 1>}]} {
    %c0 = arith.constant 0 : index
    %c0_0 = arith.constant 0 : index
    %0 = vector.load %arg1[%c0, %c0_0] : memref<4x36xbf16, #tpu.memory_space<vmem>>, vector<4x36xbf16>
    %c0_1 = arith.constant 0 : index
    %c0_2 = arith.constant 0 : index
    %1 = vector.load %arg2[%c0_1, %c0_2] : memref<36x512xbf16, #tpu.memory_space<vmem>>, vector<36x512xbf16>
    %cst = arith.constant dense<0.000000e+00> : vector<4x512xf32>
    %2 = tpu.matmul %0, %1, %cst {dimension_numbers = #tpu.dot_dimension_numbers<[1], [0], [0], [1], [0, 0, 1, 1], [], []>} : vector<4x36xbf16>, vector<36x512xbf16>, vector<4x512xf32> -> vector<4x512xf32>
    %c0_3 = arith.constant 0 : index
    %c0_4 = arith.constant 0 : index
    %3 = vector.load %arg3[%c0_3, %c0_4] : memref<4x512xf32, #tpu.memory_space<vmem>>, vector<4x512xf32>
    tpu.vector_store %arg3[%c0_3, %c0_4], %2 {strides = array<i32>} : memref<4x512xf32, #tpu.memory_space<vmem>>, vector<4x512xf32>,
    %cst_5 = arith.constant dense<0.000000e+00> : vector<4xf32>
    %4 = vector.multi_reduction <add>, %2, %cst_5 [1] : vector<4x512xf32> to vector<4xf32>
    %5 = vector.shape_cast %4 : vector<4xf32> to vector<4x1xf32>
    %6 = vector.shape_cast %5 : vector<4x1xf32> to vector<1x4x1xf32>
    %c0_6 = arith.constant 0 : index
    %c0_7 = arith.constant 0 : index
    %c0_8 = arith.constant 0 : index
    %7 = vector.load %arg4[%c0_6, %c0_7, %c0_8] : memref<1x4x1xf32, #tpu.memory_space<vmem>>, vector<1x4x1xf32>
    tpu.vector_store %arg4[%c0_6, %c0_7, %c0_8], %6 {strides = array<i32>} : memref<1x4x1xf32, #tpu.memory_space<vmem>>, vector<1x4x1xf32>,
    %8 = arith.mulf %2, %2 : vector<4x512xf32>
    %cst_9 = arith.constant dense<0.000000e+00> : vector<4xf32>
    %9 = vector.multi_reduction <add>, %8, %cst_9 [1] : vector<4x512xf32> to vector<4xf32>
    %10 = vector.shape_cast %9 : vector<4xf32> to vector<4x1xf32>
    %11 = vector.shape_cast %10 : vector<4x1xf32> to vector<1x4x1xf32>
    %c0_10 = arith.constant 0 : index
    %c0_11 = arith.constant 0 : index
    %c0_12 = arith.constant 0 : index
    %12 = vector.load %arg5[%c0_10, %c0_11, %c0_12] : memref<1x4x1xf32, #tpu.memory_space<vmem>>, vector<1x4x1xf32>
    tpu.vector_store %arg5[%c0_10, %c0_11, %c0_12], %11 {strides = array<i32>} : memref<1x4x1xf32, #tpu.memory_space<vmem>>, vector<1x4x1xf32>,
    return
  }
  func.func @transform_0(%arg0: i32) -> (i32, i32) {
    %c0_i32 = arith.constant 0 : i32
    %c0_i32_0 = arith.constant 0 : i32
    %c0_i32_1 = arith.constant 0 : i32
    return %c0_i32, %c0_i32_0 : i32, i32
  }
  func.func @transform_1(%arg0: i32) -> (i32, i32) {
    %c0_i32 = arith.constant 0 : i32
    %c0_i32_0 = arith.constant 0 : i32
    return %c0_i32, %arg0 : i32, i32
  }
  func.func @transform_2(%arg0: i32) -> (i32, i32) {
    %c0_i32 = arith.constant 0 : i32
    %c0_i32_0 = arith.constant 0 : i32
    return %c0_i32, %arg0 : i32, i32
  }
  func.func @transform_3(%arg0: i32) -> (i32, i32, i32) {
    %c0_i32 = arith.constant 0 : i32
    %c0_i32_0 = arith.constant 0 : i32
    %c0_i32_1 = arith.constant 0 : i32
    return %arg0, %c0_i32, %c0_i32_0 : i32, i32, i32
  }
  func.func @transform_4(%arg0: i32) -> (i32, i32, i32) {
    %c0_i32 = arith.constant 0 : i32
    %c0_i32_0 = arith.constant 0 : i32
    %c0_i32_1 = arith.constant 0 : i32
    return %arg0, %c0_i32, %c0_i32_0 : i32, i32, i32
  }
}

module attributes {stable_mosaic.version = 11 : i64} {
  func.func @_bn_lrelu_res_kernel(%arg0: i32, %arg1: memref<4x512xf32, #tpu.memory_space<vmem>>, %arg2: memref<4x1xf32, #tpu.memory_space<vmem>>, %arg3: memref<4x1xf32, #tpu.memory_space<vmem>>, %arg4: memref<4x512xf32, #tpu.memory_space<vmem>>, %arg5: memref<4x512xf32, #tpu.memory_space<vmem>>) attributes {dimension_semantics = [#tpu.dimension_semantics<parallel>], iteration_bounds = array<i64: 1>, scalar_prefetch = 0 : i64, scratch_operands = 0 : i64, tpu.core_type = #tpu.core_type<tc>, window_params = [{transform_indices = @transform_0, window_bounds = array<i64: 4, 512>}, {pipeline_mode = #tpu.pipeline_mode<synchronous>, transform_indices = @transform_1, window_bounds = array<i64: 4, 1>}, {pipeline_mode = #tpu.pipeline_mode<synchronous>, transform_indices = @transform_2, window_bounds = array<i64: 4, 1>}, {transform_indices = @transform_3, window_bounds = array<i64: 4, 512>}, {transform_indices = @transform_4, window_bounds = array<i64: 4, 512>}]} {
    %c0 = arith.constant 0 : index
    %c0_0 = arith.constant 0 : index
    %0 = vector.load %arg1[%c0, %c0_0] : memref<4x512xf32, #tpu.memory_space<vmem>>, vector<4x512xf32>
    %c0_1 = arith.constant 0 : index
    %c0_2 = arith.constant 0 : index
    %1 = vector.load %arg2[%c0_1, %c0_2] : memref<4x1xf32, #tpu.memory_space<vmem>>, vector<4x1xf32>
    %2 = vector.broadcast %1 : vector<4x1xf32> to vector<4x512xf32>
    %3 = arith.mulf %0, %2 : vector<4x512xf32>
    %c0_3 = arith.constant 0 : index
    %c0_4 = arith.constant 0 : index
    %4 = vector.load %arg3[%c0_3, %c0_4] : memref<4x1xf32, #tpu.memory_space<vmem>>, vector<4x1xf32>
    %5 = vector.broadcast %4 : vector<4x1xf32> to vector<4x512xf32>
    %6 = arith.addf %3, %5 : vector<4x512xf32>
    %cst = arith.constant 0.000000e+00 : f32
    %7 = vector.broadcast %cst : f32 to vector<4x512xf32>
    %8 = arith.cmpf oge, %6, %7 : vector<4x512xf32>
    %cst_5 = arith.constant 0.00999999977 : f32
    %9 = vector.broadcast %cst_5 : f32 to vector<4x512xf32>
    %10 = arith.mulf %9, %6 : vector<4x512xf32>
    %11 = arith.select %8, %6, %10 : vector<4x512xi1>, vector<4x512xf32>
    %c0_6 = arith.constant 0 : index
    %c0_7 = arith.constant 0 : index
    %12 = vector.load %arg4[%c0_6, %c0_7] : memref<4x512xf32, #tpu.memory_space<vmem>>, vector<4x512xf32>
    %13 = arith.addf %11, %12 : vector<4x512xf32>
    %c512_i32 = arith.constant 512 : i32
    %14 = arith.muli %arg0, %c512_i32 : i32
    %15 = tpu.iota {dimensions = array<i32: 1>} : vector<4x512xi32>
    %16 = vector.broadcast %14 : i32 to vector<4x512xi32>
    %17 = arith.addi %15, %16 : vector<4x512xi32>
    %c512_i32_8 = arith.constant 512 : i32
    %18 = vector.broadcast %c512_i32_8 : i32 to vector<4x512xi32>
    %19 = arith.cmpi slt, %17, %18 : vector<4x512xi32>
    %cst_9 = arith.constant 0.000000e+00 : f32
    %20 = vector.broadcast %cst_9 : f32 to vector<4x512xf32>
    %21 = arith.select %19, %13, %20 : vector<4x512xi1>, vector<4x512xf32>
    %c0_10 = arith.constant 0 : index
    %c0_11 = arith.constant 0 : index
    %22 = vector.load %arg5[%c0_10, %c0_11] : memref<4x512xf32, #tpu.memory_space<vmem>>, vector<4x512xf32>
    tpu.vector_store %arg5[%c0_10, %c0_11], %21 {strides = array<i32>} : memref<4x512xf32, #tpu.memory_space<vmem>>, vector<4x512xf32>,
    return
  }
  func.func @transform_0(%arg0: i32) -> (i32, i32) {
    %c0_i32 = arith.constant 0 : i32
    %c0_i32_0 = arith.constant 0 : i32
    return %c0_i32, %arg0 : i32, i32
  }
  func.func @transform_1(%arg0: i32) -> (i32, i32) {
    %c0_i32 = arith.constant 0 : i32
    %c0_i32_0 = arith.constant 0 : i32
    %c0_i32_1 = arith.constant 0 : i32
    return %c0_i32, %c0_i32_0 : i32, i32
  }
  func.func @transform_2(%arg0: i32) -> (i32, i32) {
    %c0_i32 = arith.constant 0 : i32
    %c0_i32_0 = arith.constant 0 : i32
    %c0_i32_1 = arith.constant 0 : i32
    return %c0_i32, %c0_i32_0 : i32, i32
  }
  func.func @transform_3(%arg0: i32) -> (i32, i32) {
    %c0_i32 = arith.constant 0 : i32
    %c0_i32_0 = arith.constant 0 : i32
    return %c0_i32, %arg0 : i32, i32
  }
  func.func @transform_4(%arg0: i32) -> (i32, i32) {
    %c0_i32 = arith.constant 0 : i32
    %c0_i32_0 = arith.constant 0 : i32
    return %c0_i32, %arg0 : i32, i32
  }
}

</mosaic_0001>

<llo_original>
// kernel: up_forward.9
$region0: #{up_forward.9}
  #allocation0 [shape = 'u32[]', space=smem, size = 0x4, offset = 0x4, fixed_abs, tag = 'smem constant byte address 0x4 - core index']
  #allocation1 [shape = 'u32[144,128]{1,0:T(1,128)}', space=vmem, size = 0x12000, scoped, tag = 'internal scratch']
  %s0 = inlined_call_operand.vmem [shape: f32[16,8], index: 0, kind: input, shape index: {}]
  %s1 = inlined_call_operand.hbm [shape: f32[8,8,8], index: 1, kind: input, shape index: {}]
  %s2 = inlined_call_operand.vmem [shape: f32[8,16], index: 2, kind: input, shape index: {}]
  %s3 = inlined_call_operand.vmem [shape: f32[8,16,16], index: 3, kind: output, shape index: {}]
  %s4 = sld [smem:[#allocation0]]
  $region49: #{up_forward.9} parent=0
    _
  %s6 = ssub.s32 1, %s4
  %s7 = scalar_select 0, %s6, %s4
  $region1: #{up_forward.9} parent=0
    #allocation2 [shape = 'u8[8192]{0}', space=vmem, size = 0x2000, scoped, tag = 'input window, operand 1']
    #allocation3 [shape = 's32[2]{0}', space=sflag, size = 0x8, scoped, tag = 'scoped memory for up_forward.9']
    %8 = vsyncpa [#allocation3], 0
    %s9 = scalar_lea.sflag [#allocation3], 1
    %10 = vsyncpa %s9, 0
    loop: start=0, step=1, limit=10
    $region2: #{up_forward.9} parent=1 // loop_pre_header
      _
    $region3: #{up_forward.9} parent=1 // loop_header
      %s12 = sphi 0, %s16
      %p13 = scmp.ge.s32.totalorder %s12, 10
      %s20 = sphi 0, %s20
      %s22 = sphi 0, %s20
      %s23 = sphi 0, %s22
      %s37 = sphi 0, %s23
      %s43 = sphi 0, %s45
      %s46 = sphi 0, %s43
      %s47 = sphi 0, %s46
      %s63 = sphi 0, %s47
      %s67 = sphi 0, %s67
      %s69 = sphi 0, %s67
      %s70 = sphi 0, %s69
      %s84 = sphi 0, %s70
      %s90 = sphi 0, %s92
      %s93 = sphi 0, %s90
      %s94 = sphi 0, %s93
      %s110 = sphi 0, %s94
    $region4: #{up_forward.9} parent=1 // loop_header_branch
      %15 = sbr.rel (%p13) target = $region8
    $region5: #{up_forward.9} parent=1 // loop_body
      %s17 = ssub.s32 %s12, 1
      %s18 = ssub.s32 %s12, 2
      %s19 = sadd.s32 %s12, 1
      %s21 = sadd.s32 %s20, 1
      %p24 = scmp.eq.s32.totalorder %s12, 7
      %p25 = scmp.ne.s32.totalorder %s20, %s22
      %p26 = scmp.eq.s32.totalorder %s12, 0
      %p27 = por %p25, %p26
      %p28 = scmp.ne.s32.totalorder %s20, %s22
      %p29 = scmp.eq.s32.totalorder %s17, 7
      %p30 = por %p28, %p29
      %p31 = scmp.ne.s32.totalorder %s22, %s23
      %p32 = scmp.eq.s32.totalorder %s17, 0
      %p33 = por %p31, %p32
      %p34 = scmp.ne.s32.totalorder %s22, %s23
      %p35 = scmp.eq.s32.totalorder %s18, 7
      %p36 = por %p34, %p35
      %p38 = scmp.ne.s32.totalorder %s23, %s37
      %p39 = scmp.eq.s32.totalorder %s18, 0
      %p40 = por %p38, %p39
      %s41 = ssub.s32 %s12, %s19
      %p42 = scmp.eq.s32.totalorder %s41, 0
      %s44 = sadd.s32 %s43, 1
      %s45 = scalar_select %p42, %s43, %s44
      %p48 = pneg %p42
      %p49 = scmp.eq.s32.totalorder %s12, 7
      %p50 = por %p48, %p49
      %p51 = scmp.ne.s32.totalorder %s43, %s46
      %p52 = scmp.eq.s32.totalorder %s12, 0
      %p53 = por %p51, %p52
      %p54 = scmp.ne.s32.totalorder %s43, %s46
      %p55 = scmp.eq.s32.totalorder %s17, 7
      %p56 = por %p54, %p55
      %p57 = scmp.ne.s32.totalorder %s46, %s47
      %p58 = scmp.eq.s32.totalorder %s17, 0
      %p59 = por %p57, %p58
      %p60 = scmp.ne.s32.totalorder %s46, %s47
      %p61 = scmp.eq.s32.totalorder %s18, 7
      %p62 = por %p60, %p61
      %p64 = scmp.ne.s32.totalorder %s47, %s63
      %p65 = scmp.eq.s32.totalorder %s18, 0
      %p66 = por %p64, %p65
      %s68 = sadd.s32 %s67, 1
      %p71 = scmp.eq.s32.totalorder %s12, 7
      %p72 = scmp.ne.s32.totalorder %s67, %s69
      %p73 = scmp.eq.s32.totalorder %s12, 0
      %p74 = por %p72, %p73
      %p75 = scmp.ne.s32.totalorder %s67, %s69
      %p76 = scmp.eq.s32.totalorder %s17, 7
      %p77 = por %p75, %p76
      %p78 = scmp.ne.s32.totalorder %s69, %s70
      %p79 = scmp.eq.s32.totalorder %s17, 0
      %p80 = por %p78, %p79
      %p81 = scmp.ne.s32.totalorder %s69, %s70
      %p82 = scmp.eq.s32.totalorder %s18, 7
      %p83 = por %p81, %p82
      %p85 = scmp.ne.s32.totalorder %s70, %s84
      %p86 = scmp.eq.s32.totalorder %s18, 0
      %p87 = por %p85, %p86
      %s88 = ssub.s32 %s12, %s19
      %p89 = scmp.eq.s32.totalorder %s88, 0
      %s91 = sadd.s32 %s90, 1
      %s92 = scalar_select %p89, %s90, %s91
      %p95 = pneg %p89
      %p96 = scmp.eq.s32.totalorder %s12, 7
      %p97 = por %p95, %p96
      %p98 = scmp.ne.s32.totalorder %s90, %s93
      %p99 = scmp.eq.s32.totalorder %s12, 0
      %p100 = por %p98, %p99
      %p101 = scmp.ne.s32.totalorder %s90, %s93
      %p102 = scmp.eq.s32.totalorder %s17, 7
      %p103 = por %p101, %p102
      %p104 = scmp.ne.s32.totalorder %s93, %s94
      %p105 = scmp.eq.s32.totalorder %s17, 0
      %p106 = por %p104, %p105
      %p107 = scmp.ne.s32.totalorder %s93, %s94
      %p108 = scmp.eq.s32.totalorder %s18, 7
      %p109 = por %p107, %p108
      %p111 = scmp.ne.s32.totalorder %s94, %s110
      %p112 = scmp.eq.s32.totalorder %s18, 0
      %p113 = por %p111, %p112
      %p114 = scmp.le.s32.totalorder 1, %s12
      %p115 = scmp.lt.s32.totalorder %s12, 9
      %p116 = pnand %p114, %p115
      %p117 = pneg %p116
      // Predicated region
      $region9: #{up_forward.9} parent=5 // pred_check
        _
      $region10: #{up_forward.9} parent=5 // pred_check_branch
        %119 = sbr.rel (%p116) target = $region12
      $region11: #{up_forward.9} parent=5 // pred_region
        %s120 = ssub.s32 %s12, 1
        // Predicated region
        $region13: #{up_forward.9} parent=11 // pred_check
          %p121 = pneg %p33
        $region14: #{up_forward.9} parent=11 // pred_check_branch
          %123 = sbr.rel (%p121) target = $region16
        $region15: #{up_forward.9} parent=11 // pred_region
          _
        $region16: #{up_forward.9} parent=11 // pred_fallthru
          _
        // Predicated region
        $region17: #{up_forward.9} parent=11 // pred_check
          %p124 = pneg %p80
        $region18: #{up_forward.9} parent=11 // pred_check_branch
          %126 = sbr.rel (%p124) target = $region20
        $region19: #{up_forward.9} parent=11 // pred_region
          _
        $region20: #{up_forward.9} parent=11 // pred_fallthru
          _
      $region12: #{up_forward.9} parent=5 // pred_fallthru
        _
      %p127 = scmp.lt.s32.totalorder %s12, 8
      // Predicated region
      $region21: #{up_forward.9} parent=5 // pred_check
        %p128 = pneg %p127
      $region22: #{up_forward.9} parent=5 // pred_check_branch
        %130 = sbr.rel (%p128) target = $region24
      $region23: #{up_forward.9} parent=5 // pred_region
        // Predicated region
        $region25: #{up_forward.9} parent=23 // pred_check
          %p131 = pneg %p53
        $region26: #{up_forward.9} parent=23 // pred_check_branch
          %133 = sbr.rel (%p131) target = $region28
        $region27: #{up_forward.9} parent=23 // pred_region
          %s134 = sand.u32 %s43, 1
          %s135 = scalar_lea.sflag [#allocation3], %s134
          %s136 = sand.u32 %s43, 1
          %s137 = smul.addr %s136, 8
          %s138 = scalar_lea.vmem [#allocation2], %s137
          %s140 = ssub.s32 128, 128
          %141 = vsyncadd %s135, %s140
          %s142 = smul.addr %s12, 128
          %s143 = scalar_lea.hbm %s1, %s142
          %s145 = sshll.u32 %s138, 4
          %s146 = int_to_ptr.vmem [resolvable:$true] %s145
          %148 = dma.hbm_to_vmem [thread:$0]  %s143, 128, %s146, %s135
        $region28: #{up_forward.9} parent=23 // pred_fallthru
          _
      $region24: #{up_forward.9} parent=5 // pred_fallthru
        _
      %p149 = scmp.le.s32.totalorder 1, %s12
      %p150 = scmp.lt.s32.totalorder %s12, 9
      %p151 = pnand %p149, %p150
      %p152 = pneg %p151
      // Predicated region
      $region29: #{up_forward.9} parent=5 // pred_check
        _
      $region30: #{up_forward.9} parent=5 // pred_check_branch
        %154 = sbr.rel (%p151) target = $region32
      $region31: #{up_forward.9} parent=5 // pred_region
        %s155 = ssub.s32 %s12, 1
        %s156 = sand.u32 %s46, 1
        %s157 = scalar_lea.sflag [#allocation3], %s156
        %s158 = sand.u32 %s46, 1
        %s159 = smul.addr %s158, 8
        %s160 = scalar_lea.vmem [#allocation2], %s159
        // Predicated region
        $region33: #{up_forward.9} parent=31 // pred_check
          %p161 = pneg %p59
        $region34: #{up_forward.9} parent=31 // pred_check_branch
          %163 = sbr.rel (%p161) target = $region36
        $region35: #{up_forward.9} parent=31 // pred_region
          %164 = dma.done %s157, 128
        $region36: #{up_forward.9} parent=31 // pred_fallthru
          _
        %p165 = pneg %p33
        %p166 = pneg %p30
        %s167 = sand.u32 %s46, 1
        %s168 = scalar_lea.sflag [#allocation3], %s167
        %s169 = sand.u32 %s46, 1
        %s170 = smul.addr %s169, 8
        %s171 = scalar_lea.vmem [#allocation2], %s170
        %p172 = pneg %p59
        %p173 = pneg %p56
        %p174 = pneg %p80
        %p175 = pneg %p77
        %p176 = pneg %p106
        %p177 = pneg %p103
        %p178 = scmp.lt.s32.totalorder %s17, 7
        %s179 = scalar_select %p178, %s17, 7
        %s180 = smul.addr %s179, 2
        %s181 = smul.addr %s180, 8
        %s182 = scalar_lea.vmem %s3, %s181
        %p183 = scmp.lt.s32.totalorder %s17, 7
        %s184 = scalar_select %p183, %s17, 7
        %s185 = smul.addr %s184, 2
        %s186 = smul.addr %s185, 8
        %s187 = scalar_lea.vmem %s3, %s186
        %v188 = vld [vmem:[%s0] sm:$0xff]
        %v189 = vld [vmem:[%s0 + $0x8] sm:$0xff]
        %v190 = vld [vmem:[%s160] sm:$0xff]
        %vm191 = vcmask 64512
        %v193 = vsel %vm191, %v188, 0
        %v196 = vsel %vm191, %v189, 0
        %198 = vmatprep.subr.mxu0 0.0
        %199 = vmatpush1.msra.mxu0 %v190
        %200 = vmatprep.subr.mxu0 0.0
        %201 = vmatpush1.msra.mxu0 0.0
        %202 = vmatprep.subr.mxu0 0.0
        %203 = vmatpush1.msra.mxu0 0.0
        %204 = vmatprep.subr.mxu0 0.0
        %205 = vmatpush1.msra.mxu0 0.0
        %206 = vmatprep.subr.mxu0 0.0
        %207 = vmatpush1.msra.mxu0 0.0
        %208 = vmatprep.subr.mxu0 0.0
        %209 = vmatpush1.msra.mxu0 0.0
        %210 = vmatprep.subr.mxu0 0.0
        %211 = vmatpush1.msra.mxu0 0.0
        %212 = vmatprep.subr.mxu0 0.0
        %213 = vmatpush1.msra.mxu0 0.0
        %214 = vmatprep.subr.mxu0 0.0
        %215 = vmatpush1.msra.mxu0 0.0
        %216 = vmatprep.subr.mxu0 0.0
        %217 = vmatpush1.msra.mxu0 0.0
        %218 = vmatprep.subr.mxu0 0.0
        %219 = vmatpush1.msra.mxu0 0.0
        %220 = vmatprep.subr.mxu0 0.0
        %221 = vmatpush1.msra.mxu0 0.0
        %222 = vmatprep.subr.mxu0 0.0
        %223 = vmatpush1.msra.mxu0 0.0
        %224 = vmatprep.subr.mxu0 0.0
        %225 = vmatpush1.msra.mxu0 0.0
        %226 = vmatprep.subr.mxu0 0.0
        %227 = vmatpush1.msra.mxu0 0.0
        %228 = vmatprep.subr.mxu0 0.0
        %229 = vmatpush1.msra.mxu0 0.0
        %230 = vmatprep.subr.mxu0 0.0
        %231 = vmatpush1.msra.mxu0 0.0
        %232 = vmatprep.subr.mxu0 0.0
        %233 = vmatpush1.msra.mxu0 0.0
        %234 = vmatprep.subr.mxu0 0.0
        %235 = vmatpush1.msra.mxu0 0.0
        %236 = vmatprep.subr.mxu0 0.0
        %237 = vmatpush1.msra.mxu0 0.0
        %238 = vmatprep.subr.mxu0 0.0
        %239 = vmatpush1.msra.mxu0 0.0
        %240 = vmatprep.subr.mxu0 0.0
        %241 = vmatpush1.msra.mxu0 0.0
        %242 = vmatprep.subr.mxu0 0.0
        %243 = vmatpush1.msra.mxu0 0.0
        %244 = vmatprep.subr.mxu0 0.0
        %245 = vmatpush1.msra.mxu0 0.0
        %246 = vmatprep.subr.mxu0 0.0
        %247 = vmatpush1.msra.mxu0 0.0
        %248 = vmatprep.subr.mxu0 0.0
        %249 = vmatpush1.msra.mxu0 0.0
        %250 = vmatprep.subr.mxu0 0.0
        %251 = vmatpush1.msra.mxu0 0.0
        %252 = vmatprep.subr.mxu0 0.0
        %253 = vmatpush1.msra.mxu0 0.0
        %254 = vmatprep.subr.mxu0 0.0
        %255 = vmatpush1.msra.mxu0 0.0
        %256 = vmatprep.subr.mxu0 0.0
        %257 = vmatpush1.msra.mxu0 0.0
        %258 = vmatprep.subr.mxu0 0.0
        %259 = vmatpush1.msra.mxu0 0.0
        %260 = vmatprep.subr.mxu0 0.0
        %261 = vmatpush1.msra.mxu0 0.0
        %262 = vmatprep.mubr.f32.mxu0 0.0
        %263 = vmatmul.mubr.f32.gmra.mrb[0].mxu0 %v193
        %v264 = vpop.f32.mrb[0].mxu0
        %v265 = vadd.f32 0.0, %v264
        %v266 = vpop.f32.mrb[0].mxu0
        %267 = vmatprep.mubr.f32.mxu0 0.0
        %268 = vmatmul.mubr.f32.gmra.mrb[0].mxu0 %v196
        %v269 = vpop.f32.mrb[0].mxu0
        %v270 = vadd.f32 0.0, %v269
        %v271 = vpop.f32.mrb[0].mxu0
        %272 = vdwg.mxu0
        %v273 = vld [vmem:[%s2] sm:$0xff]
        %v275 = vsel %vm191, %v265, 0
        %v278 = vsel %vm191, %v270, 0
        %280 = vmatprep.subr.mxu0 0.0
        %281 = vmatpush1.msra.mxu0 %v273
        %282 = vmatprep.subr.mxu0 0.0
        %283 = vmatpush1.msra.mxu0 0.0
        %284 = vmatprep.subr.mxu0 0.0
        %285 = vmatpush1.msra.mxu0 0.0
        %286 = vmatprep.subr.mxu0 0.0
        %287 = vmatpush1.msra.mxu0 0.0
        %288 = vmatprep.subr.mxu0 0.0
        %289 = vmatpush1.msra.mxu0 0.0
        %290 = vmatprep.subr.mxu0 0.0
        %291 = vmatpush1.msra.mxu0 0.0
        %292 = vmatprep.subr.mxu0 0.0
        %293 = vmatpush1.msra.mxu0 0.0
        %294 = vmatprep.subr.mxu0 0.0
        %295 = vmatpush1.msra.mxu0 0.0
        %296 = vmatprep.subr.mxu0 0.0
        %297 = vmatpush1.msra.mxu0 0.0
        %298 = vmatprep.subr.mxu0 0.0
        %299 = vmatpush1.msra.mxu0 0.0
        %300 = vmatprep.subr.mxu0 0.0
        %301 = vmatpush1.msra.mxu0 0.0
        %302 = vmatprep.subr.mxu0 0.0
        %303 = vmatpush1.msra.mxu0 0.0
        %304 = vmatprep.subr.mxu0 0.0
        %305 = vmatpush1.msra.mxu0 0.0
        %306 = vmatprep.subr.mxu0 0.0
        %307 = vmatpush1.msra.mxu0 0.0
        %308 = vmatprep.subr.mxu0 0.0
        %309 = vmatpush1.msra.mxu0 0.0
        %310 = vmatprep.subr.mxu0 0.0
        %311 = vmatpush1.msra.mxu0 0.0
        %312 = vmatprep.subr.mxu0 0.0
        %313 = vmatpush1.msra.mxu0 0.0
        %314 = vmatprep.subr.mxu0 0.0
        %315 = vmatpush1.msra.mxu0 0.0
        %316 = vmatprep.subr.mxu0 0.0
        %317 = vmatpush1.msra.mxu0 0.0
        %318 = vmatprep.subr.mxu0 0.0
        %319 = vmatpush1.msra.mxu0 0.0
        %320 = vmatprep.subr.mxu0 0.0
        %321 = vmatpush1.msra.mxu0 0.0
        %322 = vmatprep.subr.mxu0 0.0
        %323 = vmatpush1.msra.mxu0 0.0
        %324 = vmatprep.subr.mxu0 0.0
        %325 = vmatpush1.msra.mxu0 0.0
        %326 = vmatprep.subr.mxu0 0.0
        %327 = vmatpush1.msra.mxu0 0.0
        %328 = vmatprep.subr.mxu0 0.0
        %329 = vmatpush1.msra.mxu0 0.0
        %330 = vmatprep.subr.mxu0 0.0
        %331 = vmatpush1.msra.mxu0 0.0
        %332 = vmatprep.subr.mxu0 0.0
        %333 = vmatpush1.msra.mxu0 0.0
        %334 = vmatprep.subr.mxu0 0.0
        %335 = vmatpush1.msra.mxu0 0.0
        %336 = vmatprep.subr.mxu0 0.0
        %337 = vmatpush1.msra.mxu0 0.0
        %338 = vmatprep.subr.mxu0 0.0
        %339 = vmatpush1.msra.mxu0 0.0
        %340 = vmatprep.subr.mxu0 0.0
        %341 = vmatpush1.msra.mxu0 0.0
        %342 = vmatprep.subr.mxu0 0.0
        %343 = vmatpush1.msra.mxu0 0.0
        %344 = vmatprep.mubr.f32.mxu0 0.0
        %345 = vmatmul.mubr.f32.gmra.mrb[0].mxu0 %v275
        %v346 = vpop.f32.mrb[0].mxu0
        %v347 = vadd.f32 0.0, %v346
        %v348 = vpop.f32.mrb[0].mxu0
        %349 = vmatprep.mubr.f32.mxu0 0.0
        %350 = vmatmul.mubr.f32.gmra.mrb[0].mxu0 %v278
        %v351 = vpop.f32.mrb[0].mxu0
        %v352 = vadd.f32 0.0, %v351
        %v353 = vpop.f32.mrb[0].mxu0
        %354 = vdwg.mxu0
        %vm355 = vcmask 130048
        %356 = vst.msk [vmem:[%s187] sm:$0xff] %vm355, %v347
        %357 = vst.msk [vmem:[%s187 + $0x8] sm:$0xff] %vm355, %v352
        %p358 = scmp.lt.s32.totalorder %s17, 7
        %s359 = scalar_select %p358, %s17, 7
        %s360 = smul.addr %s359, 2
        %s361 = smul.addr %s360, 8
        %s362 = scalar_lea.vmem %s3, %s361
        // Predicated region
        $region37: #{up_forward.9} parent=31 // pred_check
          %p363 = pneg %p103
        $region38: #{up_forward.9} parent=31 // pred_check_branch
          %365 = sbr.rel (%p363) target = $region40
        $region39: #{up_forward.9} parent=31 // pred_region
          _
        $region40: #{up_forward.9} parent=31 // pred_fallthru
          _
      $region32: #{up_forward.9} parent=5 // pred_fallthru
        _
      %p366 = scmp.le.s32.totalorder 2, %s12
      // Predicated region
      $region41: #{up_forward.9} parent=5 // pred_check
        %p367 = pneg %p366
      $region42: #{up_forward.9} parent=5 // pred_check_branch
        %369 = sbr.rel (%p367) target = $region44
      $region43: #{up_forward.9} parent=5 // pred_region
        %s370 = ssub.s32 %s12, 2
        // Predicated region
        $region45: #{up_forward.9} parent=43 // pred_check
          %p371 = pneg %p109
        $region46: #{up_forward.9} parent=43 // pred_check_branch
          %373 = sbr.rel (%p371) target = $region48
        $region47: #{up_forward.9} parent=43 // pred_region
          %p374 = scmp.lt.s32.totalorder %s18, 7
          %s375 = scalar_select %p374, %s18, 7
          %s376 = smul.addr %s375, 2
          %s377 = smul.addr %s376, 8
          %s378 = scalar_lea.vmem %s3, %s377
        $region48: #{up_forward.9} parent=43 // pred_fallthru
          _
      $region44: #{up_forward.9} parent=5 // pred_fallthru
        _
    $region6: #{up_forward.9} parent=1 // loop_footer
      %s16 = sadd.s32 1, %s12
    $region7: #{up_forward.9} parent=1 // loop_footer_branch
      %11 = sbr.rel target = $region3
    $region8: #{up_forward.9} parent=1 // loop_exit
      _
    %379 = vsyncpa [#allocation3], 1
    %s380 = scalar_lea.sflag [#allocation3], 1
    %381 = vsyncpa %s380, 1

// kernel: up_forward.13
$region0: #{up_forward.13}
  #allocation0 [shape = 'u32[]', space=smem, size = 0x4, offset = 0x4, fixed_abs, tag = 'smem constant byte address 0x4 - core index']
  #allocation1 [shape = 'u32[144,128]{1,0:T(1,128)}', space=vmem, size = 0x12000, scoped, tag = 'internal scratch']
  %s0 = inlined_call_operand.vmem [shape: bf16[8,16], index: 0, kind: input, shape index: {}]
  %s1 = inlined_call_operand.vmem [shape: bf16[16,512], index: 1, kind: input, shape index: {}]
  %s2 = inlined_call_operand.vmem [shape: f32[8,512], index: 2, kind: output, shape index: {0}]
  %s3 = inlined_call_operand.vmem [shape: f32[1,8,1], index: 3, kind: output, shape index: {1}]
  %s4 = inlined_call_operand.vmem [shape: f32[1,8,1], index: 4, kind: output, shape index: {2}]
  %5 = xla_tuple %s2, %s3, %s4
  %s6 = sld [smem:[#allocation0]]
  $region34: #{up_forward.13} parent=0
    _
  %s8 = ssub.s32 1, %s6
  %s9 = scalar_select 0, %s8, %s6
  // Predicated region
  $region2: #{up_forward.13} parent=0 // pred_check
    _
  $region3: #{up_forward.13} parent=0 // pred_check_branch
    %11 = sbr.rel (0) target = $region5
  $region4: #{up_forward.13} parent=0 // pred_region
    _
  $region5: #{up_forward.13} parent=0 // pred_fallthru
    _
  // Predicated region
  $region6: #{up_forward.13} parent=0 // pred_check
    _
  $region7: #{up_forward.13} parent=0 // pred_check_branch
    %13 = sbr.rel (0) target = $region9
  $region8: #{up_forward.13} parent=0 // pred_region
    _
  $region9: #{up_forward.13} parent=0 // pred_fallthru
    _
  %v15 = vld [vmem:[%s0] sm:$0xf]
  %v16 = vld [vmem:[%s1] sm:$0xff]
  %v17 = vld [vmem:[%s1 + $0x8] sm:$0xff]
  %v18 = vld [vmem:[%s1 + $0x10] sm:$0xff]
  %v19 = vld [vmem:[%s1 + $0x18] sm:$0xff]
  %v24 = vunpack.c.l.b16 %v16
  %v25 = vunpack.c.h.b16 %v16
  %v26 = vunpack.c.l.b16 %v17
  %v27 = vunpack.c.h.b16 %v17
  %v28 = vunpack.c.l.b16 %v18
  %v29 = vunpack.c.h.b16 %v18
  %v30 = vunpack.c.l.b16 %v19
  %v31 = vunpack.c.h.b16 %v19
  %v32 = vpack.c.b16 %v28, %v24
  %v33 = vpack.c.b16 %v29, %v25
  %v34 = vpack.c.b16 %v30, %v26
  %v35 = vpack.c.b16 %v31, %v27
  %vm40 = vcmask 130048
  %v42 = vsel %vm40, %v15, 0
  %44 = vmatprep.subr.bf16.mxu0 %v33
  %45 = vmatpush1.bf16.msra.mxu0 %v32
  %46 = vmatprep.subr.bf16.mxu0 0
  %47 = vmatpush1.bf16.msra.mxu0 0
  %48 = vmatprep.subr.bf16.mxu0 0
  %49 = vmatpush1.bf16.msra.mxu0 0
  %50 = vmatprep.subr.bf16.mxu0 0
  %51 = vmatpush1.bf16.msra.mxu0 0
  %52 = vmatprep.subr.bf16.mxu0 0
  %53 = vmatpush1.bf16.msra.mxu0 0
  %54 = vmatprep.subr.bf16.mxu0 0
  %55 = vmatpush1.bf16.msra.mxu0 0
  %56 = vmatprep.subr.bf16.mxu0 0
  %57 = vmatpush1.bf16.msra.mxu0 0
  %58 = vmatprep.subr.bf16.mxu0 0
  %59 = vmatpush1.bf16.msra.mxu0 0
  %60 = vmatprep.subr.bf16.mxu0 0
  %61 = vmatpush1.bf16.msra.mxu0 0
  %62 = vmatprep.subr.bf16.mxu0 0
  %63 = vmatpush1.bf16.msra.mxu0 0
  %64 = vmatprep.subr.bf16.mxu0 0
  %65 = vmatpush1.bf16.msra.mxu0 0
  %66 = vmatprep.subr.bf16.mxu0 0
  %67 = vmatpush1.bf16.msra.mxu0 0
  %68 = vmatprep.subr.bf16.mxu0 0
  %69 = vmatpush1.bf16.msra.mxu0 0
  %70 = vmatprep.subr.bf16.mxu0 0
  %71 = vmatpush1.bf16.msra.mxu0 0
  %72 = vmatprep.subr.bf16.mxu0 0
  %73 = vmatpush1.bf16.msra.mxu0 0
  %74 = vmatprep.subr.bf16.mxu0 0
  %75 = vmatpush1.bf16.msra.mxu0 0
  %76 = vmatprep.mubr.bf16.mxu0 0
  %77 = vmatmul.mubr.bf16.gmra.mrb[0].mxu0 %v42
  %v78 = vpop.f32.mrb[0].mxu0
  %v79 = vadd.f32 0.0, %v78
  %v80 = vpop.f32.mrb[0].mxu0
  %v81 = vadd.f32 0.0, %v80
  %v82 = vpop.f32.mrb[0].mxu0
  %v83 = vpop.f32.mrb[0].mxu0
  %84 = vdwg.mxu0
  %85 = vmatprep.subr.bf16.mxu0 %v35
  %86 = vmatpush1.bf16.msra.mxu0 %v34
  %87 = vmatprep.subr.bf16.mxu0 0
  %88 = vmatpush1.bf16.msra.mxu0 0
  %89 = vmatprep.subr.bf16.mxu0 0
  %90 = vmatpush1.bf16.msra.mxu0 0
  %91 = vmatprep.subr.bf16.mxu0 0
  %92 = vmatpush1.bf16.msra.mxu0 0
  %93 = vmatprep.subr.bf16.mxu0 0
  %94 = vmatpush1.bf16.msra.mxu0 0
  %95 = vmatprep.subr.bf16.mxu0 0
  %96 = vmatpush1.bf16.msra.mxu0 0
  %97 = vmatprep.subr.bf16.mxu0 0
  %98 = vmatpush1.bf16.msra.mxu0 0
  %99 = vmatprep.subr.bf16.mxu0 0
  %100 = vmatpush1.bf16.msra.mxu0 0
  %101 = vmatprep.subr.bf16.mxu0 0
  %102 = vmatpush1.bf16.msra.mxu0 0
  %103 = vmatprep.subr.bf16.mxu0 0
  %104 = vmatpush1.bf16.msra.mxu0 0
  %105 = vmatprep.subr.bf16.mxu0 0
  %106 = vmatpush1.bf16.msra.mxu0 0
  %107 = vmatprep.subr.bf16.mxu0 0
  %108 = vmatpush1.bf16.msra.mxu0 0
  %109 = vmatprep.subr.bf16.mxu0 0
  %110 = vmatpush1.bf16.msra.mxu0 0
  %111 = vmatprep.subr.bf16.mxu0 0
  %112 = vmatpush1.bf16.msra.mxu0 0
  %113 = vmatprep.subr.bf16.mxu0 0
  %114 = vmatpush1.bf16.msra.mxu0 0
  %115 = vmatprep.subr.bf16.mxu0 0
  %116 = vmatpush1.bf16.msra.mxu0 0
  %117 = vmatprep.mubr.bf16.mxu0 0
  %118 = vmatmul.mubr.bf16.gmra.mrb[0].mxu0 %v42
  %v119 = vpop.f32.mrb[0].mxu0
  %v120 = vadd.f32 0.0, %v119
  %v121 = vpop.f32.mrb[0].mxu0
  %v122 = vadd.f32 0.0, %v121
  %v123 = vpop.f32.mrb[0].mxu0
  %v124 = vpop.f32.mrb[0].mxu0
  %125 = vdwg.mxu0
  %126 = vst [vmem:[%s2] sm:$0xff] %v79
  %127 = vst [vmem:[%s2 + $0x8] sm:$0xff] %v81
  %128 = vst [vmem:[%s2 + $0x10] sm:$0xff] %v120
  %129 = vst [vmem:[%s2 + $0x18] sm:$0xff] %v122
  %v130 = vadd.f32 %v79, %v81
  %v131 = vadd.f32 %v130, %v120
  %v132 = vadd.f32 %v131, %v122
  %133 = vadd.xlane.f32.xlu0 %v132
  %v134 = vpop.xlane.xlu0 %133
  %vm135 = vcmask 7168
  %136 = vst.msk [vmem:[%s3] sm:$0xff] %vm135, %v134
  %v137 = vmul.f32 %v79, %v79
  %v138 = vmul.f32 %v81, %v81
  %v139 = vmul.f32 %v120, %v120
  %v140 = vmul.f32 %v122, %v122
  %v141 = vadd.f32 %v137, %v138
  %v142 = vadd.f32 %v141, %v139
  %v143 = vadd.f32 %v142, %v140
  %144 = vadd.xlane.f32.xlu0 %v143
  %v145 = vpop.xlane.xlu0 %144
  %146 = vst.msk [vmem:[%s4] sm:$0xff] %vm135, %v145
  // Predicated region
  $region10: #{up_forward.13} parent=0 // pred_check
    _
  $region11: #{up_forward.13} parent=0 // pred_check_branch
    %148 = sbr.rel (0) target = $region13
  $region12: #{up_forward.13} parent=0 // pred_region
    _
  $region13: #{up_forward.13} parent=0 // pred_fallthru
    _
  // Predicated region
  $region14: #{up_forward.13} parent=0 // pred_check
    _
  $region15: #{up_forward.13} parent=0 // pred_check_branch
    %150 = sbr.rel (0) target = $region17
  $region16: #{up_forward.13} parent=0 // pred_region
    _
  $region17: #{up_forward.13} parent=0 // pred_fallthru
    _
  // Predicated region
  $region18: #{up_forward.13} parent=0 // pred_check
    _
  $region19: #{up_forward.13} parent=0 // pred_check_branch
    %152 = sbr.rel (0) target = $region21
  $region20: #{up_forward.13} parent=0 // pred_region
    _
  $region21: #{up_forward.13} parent=0 // pred_fallthru
    _
  // Predicated region
  $region22: #{up_forward.13} parent=0 // pred_check
    _
  $region23: #{up_forward.13} parent=0 // pred_check_branch
    %154 = sbr.rel (0) target = $region25
  $region24: #{up_forward.13} parent=0 // pred_region
    _
  $region25: #{up_forward.13} parent=0 // pred_fallthru
    _
  // Predicated region
  $region26: #{up_forward.13} parent=0 // pred_check
    _
  $region27: #{up_forward.13} parent=0 // pred_check_branch
    %156 = sbr.rel (0) target = $region29
  $region28: #{up_forward.13} parent=0 // pred_region
    _
  $region29: #{up_forward.13} parent=0 // pred_fallthru
    _
  // Predicated region
  $region30: #{up_forward.13} parent=0 // pred_check
    _
  $region31: #{up_forward.13} parent=0 // pred_check_branch
    %158 = sbr.rel (0) target = $region33
  $region32: #{up_forward.13} parent=0 // pred_region
    _
  $region33: #{up_forward.13} parent=0 // pred_fallthru
    _

// kernel: up_forward.14
$region0: #{up_forward.14}
  #allocation0 [shape = 'u32[]', space=smem, size = 0x4, offset = 0x4, fixed_abs, tag = 'smem constant byte address 0x4 - core index']
  #allocation1 [shape = 'u32[144,128]{1,0:T(1,128)}', space=vmem, size = 0x12000, scoped, tag = 'internal scratch']
  %s0 = inlined_call_operand.vmem [shape: f32[8,512], index: 0, kind: input, shape index: {}]
  %s1 = inlined_call_operand.vmem [shape: f32[8,1], index: 1, kind: input, shape index: {}]
  %s2 = inlined_call_operand.vmem [shape: f32[8,1], index: 2, kind: input, shape index: {}]
  %s3 = inlined_call_operand.vmem [shape: f32[8,512], index: 3, kind: output, shape index: {}]
  %s4 = sld [smem:[#allocation0]]
  $region22: #{up_forward.14} parent=0
    _
  %s6 = ssub.s32 1, %s4
  %s7 = scalar_select 0, %s6, %s4
  // Predicated region
  $region2: #{up_forward.14} parent=0 // pred_check
    _
  $region3: #{up_forward.14} parent=0 // pred_check_branch
    %9 = sbr.rel (0) target = $region5
  $region4: #{up_forward.14} parent=0 // pred_region
    _
  $region5: #{up_forward.14} parent=0 // pred_fallthru
    _
  // Predicated region
  $region6: #{up_forward.14} parent=0 // pred_check
    _
  $region7: #{up_forward.14} parent=0 // pred_check_branch
    %11 = sbr.rel (0) target = $region9
  $region8: #{up_forward.14} parent=0 // pred_region
    _
  $region9: #{up_forward.14} parent=0 // pred_fallthru
    _
  // Predicated region
  $region10: #{up_forward.14} parent=0 // pred_check
    _
  $region11: #{up_forward.14} parent=0 // pred_check_branch
    %13 = sbr.rel (0) target = $region13
  $region12: #{up_forward.14} parent=0 // pred_region
    _
  $region13: #{up_forward.14} parent=0 // pred_fallthru
    _
  %v14 = vld [vmem:[%s0] sm:$0xff]
  %v15 = vld [vmem:[%s0 + $0x8] sm:$0xff]
  %v16 = vld [vmem:[%s0 + $0x10] sm:$0xff]
  %v17 = vld [vmem:[%s0 + $0x18] sm:$0xff]
  %v18 = vld [vmem:[%s1] sm:$0xff]
  %20 = vset.pattern.permute.xlu0 0
  %21 = vperm.xlu0 %20, %v18
  %v22 = vpop.permute.xlu0 %21
  %v24 = vmul.f32 %v14, %v22
  %v25 = vmul.f32 %v15, %v22
  %v26 = vmul.f32 %v16, %v22
  %v27 = vmul.f32 %v17, %v22
  %v28 = vld [vmem:[%s2] sm:$0xff]
  %30 = vset.pattern.permute.xlu0 0
  %31 = vperm.xlu0 %30, %v28
  %v32 = vpop.permute.xlu0 %31
  %v34 = vadd.f32 %v24, %v32
  %v35 = vadd.f32 %v25, %v32
  %v36 = vadd.f32 %v26, %v32
  %v37 = vadd.f32 %v27, %v32
  %vm38 = vcmp.ge.f32.partialorder %v34, 0.0
  %vm39 = vcmp.ge.f32.partialorder %v35, 0.0
  %vm40 = vcmp.ge.f32.partialorder %v36, 0.0
  %vm41 = vcmp.ge.f32.partialorder %v37, 0.0
  %v42 = vmul.f32 %v34, 0.01
  %v43 = vmul.f32 %v35, 0.01
  %v44 = vmul.f32 %v36, 0.01
  %v45 = vmul.f32 %v37, 0.01
  %v46 = vsel %vm38, %v34, %v42
  %v47 = vsel %vm39, %v35, %v43
  %v48 = vsel %vm40, %v36, %v44
  %v49 = vsel %vm41, %v37, %v45
  %s50 = smul.u32 0, 512
  %v51 = vlaneseq
  %v52 = vand.u32 %v51, 127
  %v53 = vadd.s32 %v52, 128
  %v54 = vadd.s32 %v52, 256
  %v55 = vadd.s32 %v52, 384
  %v56 = vstv %s50
  %v57 = vadd.s32 %v52, %v56
  %v58 = vadd.s32 %v53, %v56
  %v59 = vadd.s32 %v54, %v56
  %v60 = vadd.s32 %v55, %v56
  %vm61 = vcmp.lt.s32.totalorder %v57, 288
  %vm62 = vcmp.lt.s32.totalorder %v58, 288
  %vm63 = vcmp.lt.s32.totalorder %v59, 288
  %vm64 = vcmp.lt.s32.totalorder %v60, 288
  %v65 = vsel %vm61, %v46, 0.0
  %v66 = vsel %vm62, %v47, 0.0
  %v67 = vsel %vm63, %v48, 0.0
  %v68 = vsel %vm64, %v49, 0.0
  %69 = vst [vmem:[%s3] sm:$0xff] %v65
  %70 = vst [vmem:[%s3 + $0x8] sm:$0xff] %v66
  %71 = vst [vmem:[%s3 + $0x10] sm:$0xff] %v67
  %72 = vst [vmem:[%s3 + $0x18] sm:$0xff] %v68
  // Predicated region
  $region14: #{up_forward.14} parent=0 // pred_check
    _
  $region15: #{up_forward.14} parent=0 // pred_check_branch
    %74 = sbr.rel (0) target = $region17
  $region16: #{up_forward.14} parent=0 // pred_region
    _
  $region17: #{up_forward.14} parent=0 // pred_fallthru
    _
  // Predicated region
  $region18: #{up_forward.14} parent=0 // pred_check
    _
  $region19: #{up_forward.14} parent=0 // pred_check_branch
    %76 = sbr.rel (0) target = $region21
  $region20: #{up_forward.14} parent=0 // pred_region
    _
  $region21: #{up_forward.14} parent=0 // pred_fallthru
    _

// kernel: up_forward.15
$region0: #{up_forward.15}
  #allocation0 [shape = 'u32[]', space=smem, size = 0x4, offset = 0x4, fixed_abs, tag = 'smem constant byte address 0x4 - core index']
  #allocation1 [shape = 'u32[144,128]{1,0:T(1,128)}', space=vmem, size = 0x12000, scoped, tag = 'internal scratch']
  %s0 = inlined_call_operand.vmem [shape: bf16[8,8], index: 0, kind: input, shape index: {}]
  %s1 = inlined_call_operand.vmem [shape: bf16[8,512], index: 1, kind: input, shape index: {}]
  %s2 = inlined_call_operand.vmem [shape: f32[8,512], index: 2, kind: output, shape index: {0}]
  %s3 = inlined_call_operand.vmem [shape: f32[1,8,1], index: 3, kind: output, shape index: {1}]
  %s4 = inlined_call_operand.vmem [shape: f32[1,8,1], index: 4, kind: output, shape index: {2}]
  %5 = xla_tuple %s2, %s3, %s4
  %s6 = sld [smem:[#allocation0]]
  $region34: #{up_forward.15} parent=0
    _
  %s8 = ssub.s32 1, %s6
  %s9 = scalar_select 0, %s8, %s6
  // Predicated region
  $region2: #{up_forward.15} parent=0 // pred_check
    _
  $region3: #{up_forward.15} parent=0 // pred_check_branch
    %11 = sbr.rel (0) target = $region5
  $region4: #{up_forward.15} parent=0 // pred_region
    _
  $region5: #{up_forward.15} parent=0 // pred_fallthru
    _
  // Predicated region
  $region6: #{up_forward.15} parent=0 // pred_check
    _
  $region7: #{up_forward.15} parent=0 // pred_check_branch
    %13 = sbr.rel (0) target = $region9
  $region8: #{up_forward.15} parent=0 // pred_region
    _
  $region9: #{up_forward.15} parent=0 // pred_fallthru
    _
  %v15 = vld [vmem:[%s0] sm:$0xf]
  %v16 = vld [vmem:[%s1] sm:$0xff]
  %v17 = vld [vmem:[%s1 + $0x8] sm:$0xff]
  %v20 = vunpack.c.l.b16 %v16
  %v21 = vunpack.c.h.b16 %v16
  %v22 = vunpack.c.l.b16 %v17
  %v23 = vunpack.c.h.b16 %v17
  %v24 = vpack.c.b16 %v20, %v20
  %v25 = vpack.c.b16 %v21, %v21
  %v26 = vpack.c.b16 %v22, %v22
  %v27 = vpack.c.b16 %v23, %v23
  %vm28 = vcmask 64512
  %v30 = vsel %vm28, %v15, 0
  %vm32 = vcmask 1043456
  %v34 = vsel %vm32, %v24, 0
  %v37 = vsel %vm32, %v25, 0
  %v40 = vsel %vm32, %v26, 0
  %v43 = vsel %vm32, %v27, 0
  %45 = vmatprep.subr.bf16.mxu0 %v37
  %46 = vmatpush1.bf16.msra.mxu0 %v34
  %47 = vmatprep.subr.bf16.mxu0 0
  %48 = vmatpush1.bf16.msra.mxu0 0
  %49 = vmatprep.subr.bf16.mxu0 0
  %50 = vmatpush1.bf16.msra.mxu0 0
  %51 = vmatprep.subr.bf16.mxu0 0
  %52 = vmatpush1.bf16.msra.mxu0 0
  %53 = vmatprep.subr.bf16.mxu0 0
  %54 = vmatpush1.bf16.msra.mxu0 0
  %55 = vmatprep.subr.bf16.mxu0 0
  %56 = vmatpush1.bf16.msra.mxu0 0
  %57 = vmatprep.subr.bf16.mxu0 0
  %58 = vmatpush1.bf16.msra.mxu0 0
  %59 = vmatprep.subr.bf16.mxu0 0
  %60 = vmatpush1.bf16.msra.mxu0 0
  %61 = vmatprep.subr.bf16.mxu0 0
  %62 = vmatpush1.bf16.msra.mxu0 0
  %63 = vmatprep.subr.bf16.mxu0 0
  %64 = vmatpush1.bf16.msra.mxu0 0
  %65 = vmatprep.subr.bf16.mxu0 0
  %66 = vmatpush1.bf16.msra.mxu0 0
  %67 = vmatprep.subr.bf16.mxu0 0
  %68 = vmatpush1.bf16.msra.mxu0 0
  %69 = vmatprep.subr.bf16.mxu0 0
  %70 = vmatpush1.bf16.msra.mxu0 0
  %71 = vmatprep.subr.bf16.mxu0 0
  %72 = vmatpush1.bf16.msra.mxu0 0
  %73 = vmatprep.subr.bf16.mxu0 0
  %74 = vmatpush1.bf16.msra.mxu0 0
  %75 = vmatprep.subr.bf16.mxu0 0
  %76 = vmatpush1.bf16.msra.mxu0 0
  %77 = vmatprep.mubr.bf16.mxu0 0
  %78 = vmatmul.mubr.bf16.gmra.mrb[0].mxu0 %v30
  %v79 = vpop.f32.mrb[0].mxu0
  %v80 = vadd.f32 0.0, %v79
  %v81 = vpop.f32.mrb[0].mxu0
  %v82 = vadd.f32 0.0, %v81
  %v83 = vpop.f32.mrb[0].mxu0
  %v84 = vpop.f32.mrb[0].mxu0
  %85 = vdwg.mxu0
  %86 = vmatprep.subr.bf16.mxu0 %v43
  %87 = vmatpush1.bf16.msra.mxu0 %v40
  %88 = vmatprep.subr.bf16.mxu0 0
  %89 = vmatpush1.bf16.msra.mxu0 0
  %90 = vmatprep.subr.bf16.mxu0 0
  %91 = vmatpush1.bf16.msra.mxu0 0
  %92 = vmatprep.subr.bf16.mxu0 0
  %93 = vmatpush1.bf16.msra.mxu0 0
  %94 = vmatprep.subr.bf16.mxu0 0
  %95 = vmatpush1.bf16.msra.mxu0 0
  %96 = vmatprep.subr.bf16.mxu0 0
  %97 = vmatpush1.bf16.msra.mxu0 0
  %98 = vmatprep.subr.bf16.mxu0 0
  %99 = vmatpush1.bf16.msra.mxu0 0
  %100 = vmatprep.subr.bf16.mxu0 0
  %101 = vmatpush1.bf16.msra.mxu0 0
  %102 = vmatprep.subr.bf16.mxu0 0
  %103 = vmatpush1.bf16.msra.mxu0 0
  %104 = vmatprep.subr.bf16.mxu0 0
  %105 = vmatpush1.bf16.msra.mxu0 0
  %106 = vmatprep.subr.bf16.mxu0 0
  %107 = vmatpush1.bf16.msra.mxu0 0
  %108 = vmatprep.subr.bf16.mxu0 0
  %109 = vmatpush1.bf16.msra.mxu0 0
  %110 = vmatprep.subr.bf16.mxu0 0
  %111 = vmatpush1.bf16.msra.mxu0 0
  %112 = vmatprep.subr.bf16.mxu0 0
  %113 = vmatpush1.bf16.msra.mxu0 0
  %114 = vmatprep.subr.bf16.mxu0 0
  %115 = vmatpush1.bf16.msra.mxu0 0
  %116 = vmatprep.subr.bf16.mxu0 0
  %117 = vmatpush1.bf16.msra.mxu0 0
  %118 = vmatprep.mubr.bf16.mxu0 0
  %119 = vmatmul.mubr.bf16.gmra.mrb[0].mxu0 %v30
  %v120 = vpop.f32.mrb[0].mxu0
  %v121 = vadd.f32 0.0, %v120
  %v122 = vpop.f32.mrb[0].mxu0
  %v123 = vadd.f32 0.0, %v122
  %v124 = vpop.f32.mrb[0].mxu0
  %v125 = vpop.f32.mrb[0].mxu0
  %126 = vdwg.mxu0
  %127 = vst [vmem:[%s2] sm:$0xff] %v80
  %128 = vst [vmem:[%s2 + $0x8] sm:$0xff] %v82
  %129 = vst [vmem:[%s2 + $0x10] sm:$0xff] %v121
  %130 = vst [vmem:[%s2 + $0x18] sm:$0xff] %v123
  %v131 = vadd.f32 %v80, %v82
  %v132 = vadd.f32 %v131, %v121
  %v133 = vadd.f32 %v132, %v123
  %134 = vadd.xlane.f32.xlu0 %v133
  %v135 = vpop.xlane.xlu0 %134
  %vm136 = vcmask 7168
  %137 = vst.msk [vmem:[%s3] sm:$0xff] %vm136, %v135
  %v138 = vmul.f32 %v80, %v80
  %v139 = vmul.f32 %v82, %v82
  %v140 = vmul.f32 %v121, %v121
  %v141 = vmul.f32 %v123, %v123
  %v142 = vadd.f32 %v138, %v139
  %v143 = vadd.f32 %v142, %v140
  %v144 = vadd.f32 %v143, %v141
  %145 = vadd.xlane.f32.xlu0 %v144
  %v146 = vpop.xlane.xlu0 %145
  %147 = vst.msk [vmem:[%s4] sm:$0xff] %vm136, %v146
  // Predicated region
  $region10: #{up_forward.15} parent=0 // pred_check
    _
  $region11: #{up_forward.15} parent=0 // pred_check_branch
    %149 = sbr.rel (0) target = $region13
  $region12: #{up_forward.15} parent=0 // pred_region
    _
  $region13: #{up_forward.15} parent=0 // pred_fallthru
    _
  // Predicated region
  $region14: #{up_forward.15} parent=0 // pred_check
    _
  $region15: #{up_forward.15} parent=0 // pred_check_branch
    %151 = sbr.rel (0) target = $region17
  $region16: #{up_forward.15} parent=0 // pred_region
    _
  $region17: #{up_forward.15} parent=0 // pred_fallthru
    _
  // Predicated region
  $region18: #{up_forward.15} parent=0 // pred_check
    _
  $region19: #{up_forward.15} parent=0 // pred_check_branch
    %153 = sbr.rel (0) target = $region21
  $region20: #{up_forward.15} parent=0 // pred_region
    _
  $region21: #{up_forward.15} parent=0 // pred_fallthru
    _
  // Predicated region
  $region22: #{up_forward.15} parent=0 // pred_check
    _
  $region23: #{up_forward.15} parent=0 // pred_check_branch
    %155 = sbr.rel (0) target = $region25
  $region24: #{up_forward.15} parent=0 // pred_region
    _
  $region25: #{up_forward.15} parent=0 // pred_fallthru
    _
  // Predicated region
  $region26: #{up_forward.15} parent=0 // pred_check
    _
  $region27: #{up_forward.15} parent=0 // pred_check_branch
    %157 = sbr.rel (0) target = $region29
  $region28: #{up_forward.15} parent=0 // pred_region
    _
  $region29: #{up_forward.15} parent=0 // pred_fallthru
    _
  // Predicated region
  $region30: #{up_forward.15} parent=0 // pred_check
    _
  $region31: #{up_forward.15} parent=0 // pred_check_branch
    %159 = sbr.rel (0) target = $region33
  $region32: #{up_forward.15} parent=0 // pred_region
    _
  $region33: #{up_forward.15} parent=0 // pred_fallthru
    _

// kernel: reverse.0
$region0: #{reverse.0}
  %s0 = inlined_call_operand.vmem [shape: f32[2,4,16,7], index: 0, kind: input, shape index: {}]
  %s1 = inlined_call_operand.vmem [shape: f32[2,4,16,7], index: 1, kind: output, shape index: {}]
  $region1: #{reverse.0} parent=0
    #allocation0 [shape = 'u8[65536]{0}', space=vmem, size = 0x10000, scoped, tag = 'operand span for operand 0']
    #allocation1 [shape = 'u8[32768]{0}', space=vmem, size = 0x8000, scoped, tag = 'operand span for operand 1']
    %s2 = scalar_lea.vmem [#allocation0], 8
    // Predicated region
    $region2: #{reverse.0} parent=1 // pred_check
      _
    $region3: #{reverse.0} parent=1 // pred_check_branch
      %4 = sbr.rel (0) target = $region5
    $region4: #{reverse.0} parent=1 // pred_region
      // Predicated region
      $region6: #{reverse.0} parent=4 // pred_check
        _
      $region7: #{reverse.0} parent=4 // pred_check_branch
        %6 = sbr.rel (0) target = $region9
      $region8: #{reverse.0} parent=4 // pred_region
        // Predicated region
        $region21: #{reverse.0} parent=8 // pred_check
          _
        $region22: #{reverse.0} parent=8 // pred_check_branch
          %35 = sbr.rel (0) target = $region24
        $region23: #{reverse.0} parent=8 // pred_region
          loop: start=0, step=1, limit=1
          $region25: #{reverse.0} parent=23 // loop_pre_header
            _
          $region26: #{reverse.0} parent=23 // loop_header
            %s37 = sphi 0, %s41
            %p38 = scmp.ge.s32.totalorder %s37, 1
            %s42 = sphi %s0, %s0
            %s43 = sphi %s2, %s2
          $region27: #{reverse.0} parent=23 // loop_header_branch
            %40 = sbr.rel (%p38) target = $region31
          $region28: #{reverse.0} parent=23 // loop_body
            %v44 = vld [vmem:[%s42] sm:$0xff]
            %45 = vst [vmem:[%s43] sm:$0xff] %v44
            %v46 = vld [vmem:[%s42 + $0x8] sm:$0xff]
            %47 = vst [vmem:[%s43 + $0x10] sm:$0xff] %v46
            %v48 = vld [vmem:[%s42 + $0x10] sm:$0xff]
            %49 = vst [vmem:[%s43 + $0x20] sm:$0xff] %v48
            %v50 = vld [vmem:[%s42 + $0x18] sm:$0xff]
            %51 = vst [vmem:[%s43 + $0x30] sm:$0xff] %v50
            %v52 = vld [vmem:[%s42 + $0x20] sm:$0xff]
            %53 = vst [vmem:[%s43 + $0x40] sm:$0xff] %v52
            %v54 = vld [vmem:[%s42 + $0x28] sm:$0xff]
            %55 = vst [vmem:[%s43 + $0x50] sm:$0xff] %v54
            %v56 = vld [vmem:[%s42 + $0x30] sm:$0xff]
            %57 = vst [vmem:[%s43 + $0x60] sm:$0xff] %v56
            %v58 = vld [vmem:[%s42 + $0x38] sm:$0xff]
            %59 = vst [vmem:[%s43 + $0x70] sm:$0xff] %v58
          $region29: #{reverse.0} parent=23 // loop_footer
            %s41 = sadd.s32 1, %s37
          $region30: #{reverse.0} parent=23 // loop_footer_branch
            %36 = sbr.rel target = $region26
          $region31: #{reverse.0} parent=23 // loop_exit
            _
        $region24: #{reverse.0} parent=8 // pred_fallthru
          _
        // Predicated region
        $region32: #{reverse.0} parent=8 // pred_check
          _
        $region33: #{reverse.0} parent=8 // pred_check_branch
          %61 = sbr.rel target = $region35
        $region34: #{reverse.0} parent=8 // pred_region
          _
        $region35: #{reverse.0} parent=8 // pred_fallthru
          _
      $region9: #{reverse.0} parent=4 // pred_fallthru
        _
      // Predicated region
      $region10: #{reverse.0} parent=4 // pred_check
        _
      $region11: #{reverse.0} parent=4 // pred_check_branch
        %8 = sbr.rel target = $region13
      $region12: #{reverse.0} parent=4 // pred_region
        loop: start=0, step=1, limit=1
        $region14: #{reverse.0} parent=12 // loop_pre_header
          _
        $region15: #{reverse.0} parent=12 // loop_header
          %s11 = sphi 0, %s15
          %p12 = scmp.ge.s32.totalorder %s11, 1
          %s16 = sphi %s0, %s0
          %s17 = sphi %s2, %s2
        $region16: #{reverse.0} parent=12 // loop_header_branch
          %14 = sbr.rel (%p12) target = $region20
        $region17: #{reverse.0} parent=12 // loop_body
          %v18 = vld [vmem:[%s16] sm:$0xff]
          %19 = vst [vmem:[%s17] sm:$0xff] %v18
          %v20 = vld [vmem:[%s16 + $0x8] sm:$0xff]
          %21 = vst [vmem:[%s17 + $0x10] sm:$0xff] %v20
          %v22 = vld [vmem:[%s16 + $0x10] sm:$0xff]
          %23 = vst [vmem:[%s17 + $0x20] sm:$0xff] %v22
          %v24 = vld [vmem:[%s16 + $0x18] sm:$0xff]
          %25 = vst [vmem:[%s17 + $0x30] sm:$0xff] %v24
          %v26 = vld [vmem:[%s16 + $0x20] sm:$0xff]
          %27 = vst [vmem:[%s17 + $0x40] sm:$0xff] %v26
          %v28 = vld [vmem:[%s16 + $0x28] sm:$0xff]
          %29 = vst [vmem:[%s17 + $0x50] sm:$0xff] %v28
          %v30 = vld [vmem:[%s16 + $0x30] sm:$0xff]
          %31 = vst [vmem:[%s17 + $0x60] sm:$0xff] %v30
          %v32 = vld [vmem:[%s16 + $0x38] sm:$0xff]
          %33 = vst [vmem:[%s17 + $0x70] sm:$0xff] %v32
        $region18: #{reverse.0} parent=12 // loop_footer
          %s15 = sadd.s32 1, %s11
        $region19: #{reverse.0} parent=12 // loop_footer_branch
          %10 = sbr.rel target = $region15
        $region20: #{reverse.0} parent=12 // loop_exit
          _
      $region13: #{reverse.0} parent=4 // pred_fallthru
        _
    $region5: #{reverse.0} parent=1 // pred_fallthru
      _
    %62 = vnop
    %s63 = scalar_lea.vmem [#allocation0], 7
    %v64 = vld [vmem:[%s63] ss:$-1 sm:$0xff]
    %v65 = vrot.slane %v64, 1
    %66 = vst [vmem:[#allocation1] sm:$0xff] %v65
    %s67 = scalar_lea.vmem [#allocation0], 8
    %s68 = scalar_lea.vmem %s67, 7 [#allocation0]
    %v69 = vld [vmem:[%s68] ss:$-1 sm:$0xff]
    %v70 = vrot.slane %v69, 1
    %v71 = vlaneseq
    %v72 = vshrl.u32 %v71, 7
    %vm73 = vcmp.lt.s32.totalorder %v72, 7
    %74 = vst.msk [vmem:[#allocation1] sm:$0xff] %vm73, %v70
    %s75 = scalar_lea.vmem [#allocation1], 8
    %s76 = scalar_lea.vmem [#allocation0], 16
    %s77 = scalar_lea.vmem %s76, 7 [#allocation0]
    %v78 = vld [vmem:[%s77] ss:$-1 sm:$0xff]
    %v79 = vrot.slane %v78, 1
    %80 = vst [vmem:[%s75] sm:$0xff] %v79
    %s81 = scalar_lea.vmem %s76, 8 [#allocation0]
    %s82 = scalar_lea.vmem %s81, 7 [#allocation0]
    %v83 = vld [vmem:[%s82] ss:$-1 sm:$0xff]
    %v84 = vrot.slane %v83, 1
    %v85 = vlaneseq
    %v86 = vshrl.u32 %v85, 7
    %vm87 = vcmp.lt.s32.totalorder %v86, 7
    %88 = vst.msk [vmem:[%s75] sm:$0xff] %vm87, %v84
    %s89 = scalar_lea.vmem [#allocation1], 16
    %s90 = scalar_lea.vmem [#allocation0], 32
    %s91 = scalar_lea.vmem %s90, 7 [#allocation0]
    %v92 = vld [vmem:[%s91] ss:$-1 sm:$0xff]
    %v93 = vrot.slane %v92, 1
    %94 = vst [vmem:[%s89] sm:$0xff] %v93
    %s95 = scalar_lea.vmem %s90, 8 [#allocation0]
    %s96 = scalar_lea.vmem %s95, 7 [#allocation0]
    %v97 = vld [vmem:[%s96] ss:$-1 sm:$0xff]
    %v98 = vrot.slane %v97, 1
    %v99 = vlaneseq
    %v100 = vshrl.u32 %v99, 7
    %vm101 = vcmp.lt.s32.totalorder %v100, 7
    %102 = vst.msk [vmem:[%s89] sm:$0xff] %vm101, %v98
    %s103 = scalar_lea.vmem [#allocation1], 24
    %s104 = scalar_lea.vmem [#allocation0], 48
    %s105 = scalar_lea.vmem %s104, 7 [#allocation0]
    %v106 = vld [vmem:[%s105] ss:$-1 sm:$0xff]
    %v107 = vrot.slane %v106, 1
    %108 = vst [vmem:[%s103] sm:$0xff] %v107
    %s109 = scalar_lea.vmem %s104, 8 [#allocation0]
    %s110 = scalar_lea.vmem %s109, 7 [#allocation0]
    %v111 = vld [vmem:[%s110] ss:$-1 sm:$0xff]
    %v112 = vrot.slane %v111, 1
    %v113 = vlaneseq
    %v114 = vshrl.u32 %v113, 7
    %vm115 = vcmp.lt.s32.totalorder %v114, 7
    %116 = vst.msk [vmem:[%s103] sm:$0xff] %vm115, %v112
    %s117 = scalar_lea.vmem [#allocation1], 32
    %s118 = scalar_lea.vmem [#allocation0], 64
    %s119 = scalar_lea.vmem %s118, 7 [#allocation0]
    %v120 = vld [vmem:[%s119] ss:$-1 sm:$0xff]
    %v121 = vrot.slane %v120, 1
    %122 = vst [vmem:[%s117] sm:$0xff] %v121
    %s123 = scalar_lea.vmem %s118, 8 [#allocation0]
    %s124 = scalar_lea.vmem %s123, 7 [#allocation0]
    %v125 = vld [vmem:[%s124] ss:$-1 sm:$0xff]
    %v126 = vrot.slane %v125, 1
    %v127 = vlaneseq
    %v128 = vshrl.u32 %v127, 7
    %vm129 = vcmp.lt.s32.totalorder %v128, 7
    %130 = vst.msk [vmem:[%s117] sm:$0xff] %vm129, %v126
    %s131 = scalar_lea.vmem [#allocation1], 40
    %s132 = scalar_lea.vmem [#allocation0], 80
    %s133 = scalar_lea.vmem %s132, 7 [#allocation0]
    %v134 = vld [vmem:[%s133] ss:$-1 sm:$0xff]
    %v135 = vrot.slane %v134, 1
    %136 = vst [vmem:[%s131] sm:$0xff] %v135
    %s137 = scalar_lea.vmem %s132, 8 [#allocation0]
    %s138 = scalar_lea.vmem %s137, 7 [#allocation0]
    %v139 = vld [vmem:[%s138] ss:$-1 sm:$0xff]
    %v140 = vrot.slane %v139, 1
    %v141 = vlaneseq
    %v142 = vshrl.u32 %v141, 7
    %vm143 = vcmp.lt.s32.totalorder %v142, 7
    %144 = vst.msk [vmem:[%s131] sm:$0xff] %vm143, %v140
    %s145 = scalar_lea.vmem [#allocation1], 48
    %s146 = scalar_lea.vmem [#allocation0], 96
    %s147 = scalar_lea.vmem %s146, 7 [#allocation0]
    %v148 = vld [vmem:[%s147] ss:$-1 sm:$0xff]
    %v149 = vrot.slane %v148, 1
    %150 = vst [vmem:[%s145] sm:$0xff] %v149
    %s151 = scalar_lea.vmem %s146, 8 [#allocation0]
    %s152 = scalar_lea.vmem %s151, 7 [#allocation0]
    %v153 = vld [vmem:[%s152] ss:$-1 sm:$0xff]
    %v154 = vrot.slane %v153, 1
    %v155 = vlaneseq
    %v156 = vshrl.u32 %v155, 7
    %vm157 = vcmp.lt.s32.totalorder %v156, 7
    %158 = vst.msk [vmem:[%s145] sm:$0xff] %vm157, %v154
    %s159 = scalar_lea.vmem [#allocation1], 56
    %s160 = scalar_lea.vmem [#allocation0], 112
    %s161 = scalar_lea.vmem %s160, 7 [#allocation0]
    %v162 = vld [vmem:[%s161] ss:$-1 sm:$0xff]
    %v163 = vrot.slane %v162, 1
    %164 = vst [vmem:[%s159] sm:$0xff] %v163
    %s165 = scalar_lea.vmem %s160, 8 [#allocation0]
    %s166 = scalar_lea.vmem %s165, 7 [#allocation0]
    %v167 = vld [vmem:[%s166] ss:$-1 sm:$0xff]
    %v168 = vrot.slane %v167, 1
    %v169 = vlaneseq
    %v170 = vshrl.u32 %v169, 7
    %vm171 = vcmp.lt.s32.totalorder %v170, 7
    %172 = vst.msk [vmem:[%s159] sm:$0xff] %vm171, %v168
    // Predicated region
    $region36: #{reverse.0} parent=1 // pred_check
      _
    $region37: #{reverse.0} parent=1 // pred_check_branch
      %174 = sbr.rel (0) target = $region39
    $region38: #{reverse.0} parent=1 // pred_region
      // Predicated region
      $region40: #{reverse.0} parent=38 // pred_check
        _
      $region41: #{reverse.0} parent=38 // pred_check_branch
        %176 = sbr.rel (0) target = $region43
      $region42: #{reverse.0} parent=38 // pred_region
        // Predicated region
        $region55: #{reverse.0} parent=42 // pred_check
          _
        $region56: #{reverse.0} parent=42 // pred_check_branch
          %205 = sbr.rel (0) target = $region58
        $region57: #{reverse.0} parent=42 // pred_region
          loop: start=0, step=1, limit=1
          $region59: #{reverse.0} parent=57 // loop_pre_header
            _
          $region60: #{reverse.0} parent=57 // loop_header
            %s207 = sphi 0, %s211
            %p208 = scmp.ge.s32.totalorder %s207, 1
            %s212 = sphi [#allocation1], [#allocation1]
            %s213 = sphi %s1, %s1
          $region61: #{reverse.0} parent=57 // loop_header_branch
            %210 = sbr.rel (%p208) target = $region65
          $region62: #{reverse.0} parent=57 // loop_body
            %v214 = vld [vmem:[%s212] sm:$0xff]
            %215 = vst [vmem:[%s213] sm:$0xff] %v214
            %v216 = vld [vmem:[%s212 + $0x8] sm:$0xff]
            %217 = vst [vmem:[%s213 + $0x8] sm:$0xff] %v216
            %v218 = vld [vmem:[%s212 + $0x10] sm:$0xff]
            %219 = vst [vmem:[%s213 + $0x10] sm:$0xff] %v218
            %v220 = vld [vmem:[%s212 + $0x18] sm:$0xff]
            %221 = vst [vmem:[%s213 + $0x18] sm:$0xff] %v220
            %v222 = vld [vmem:[%s212 + $0x20] sm:$0xff]
            %223 = vst [vmem:[%s213 + $0x20] sm:$0xff] %v222
            %v224 = vld [vmem:[%s212 + $0x28] sm:$0xff]
            %225 = vst [vmem:[%s213 + $0x28] sm:$0xff] %v224
            %v226 = vld [vmem:[%s212 + $0x30] sm:$0xff]
            %227 = vst [vmem:[%s213 + $0x30] sm:$0xff] %v226
            %v228 = vld [vmem:[%s212 + $0x38] sm:$0xff]
            %229 = vst [vmem:[%s213 + $0x38] sm:$0xff] %v228
          $region63: #{reverse.0} parent=57 // loop_footer
            %s211 = sadd.s32 1, %s207
          $region64: #{reverse.0} parent=57 // loop_footer_branch
            %206 = sbr.rel target = $region60
          $region65: #{reverse.0} parent=57 // loop_exit
            _
        $region58: #{reverse.0} parent=42 // pred_fallthru
          _
        // Predicated region
        $region66: #{reverse.0} parent=42 // pred_check
          _
        $region67: #{reverse.0} parent=42 // pred_check_branch
          %231 = sbr.rel target = $region69
        $region68: #{reverse.0} parent=42 // pred_region
          _
        $region69: #{reverse.0} parent=42 // pred_fallthru
          _
      $region43: #{reverse.0} parent=38 // pred_fallthru
        _
      // Predicated region
      $region44: #{reverse.0} parent=38 // pred_check
        _
      $region45: #{reverse.0} parent=38 // pred_check_branch
        %178 = sbr.rel target = $region47
      $region46: #{reverse.0} parent=38 // pred_region
        loop: start=0, step=1, limit=1
        $region48: #{reverse.0} parent=46 // loop_pre_header
          _
        $region49: #{reverse.0} parent=46 // loop_header
          %s181 = sphi 0, %s185
          %p182 = scmp.ge.s32.totalorder %s181, 1
          %s186 = sphi [#allocation1], [#allocation1]
          %s187 = sphi %s1, %s1
        $region50: #{reverse.0} parent=46 // loop_header_branch
          %184 = sbr.rel (%p182) target = $region54
        $region51: #{reverse.0} parent=46 // loop_body
          %v188 = vld [vmem:[%s186] sm:$0xff]
          %189 = vst [vmem:[%s187] sm:$0xff] %v188
          %v190 = vld [vmem:[%s186 + $0x8] sm:$0xff]
          %191 = vst [vmem:[%s187 + $0x8] sm:$0xff] %v190
          %v192 = vld [vmem:[%s186 + $0x10] sm:$0xff]
          %193 = vst [vmem:[%s187 + $0x10] sm:$0xff] %v192
          %v194 = vld [vmem:[%s186 + $0x18] sm:$0xff]
          %195 = vst [vmem:[%s187 + $0x18] sm:$0xff] %v194
          %v196 = vld [vmem:[%s186 + $0x20] sm:$0xff]
          %197 = vst [vmem:[%s187 + $0x20] sm:$0xff] %v196
          %v198 = vld [vmem:[%s186 + $0x28] sm:$0xff]
          %199 = vst [vmem:[%s187 + $0x28] sm:$0xff] %v198
          %v200 = vld [vmem:[%s186 + $0x30] sm:$0xff]
          %201 = vst [vmem:[%s187 + $0x30] sm:$0xff] %v200
          %v202 = vld [vmem:[%s186 + $0x38] sm:$0xff]
          %203 = vst [vmem:[%s187 + $0x38] sm:$0xff] %v202
        $region52: #{reverse.0} parent=46 // loop_footer
          %s185 = sadd.s32 1, %s181
        $region53: #{reverse.0} parent=46 // loop_footer_branch
          %180 = sbr.rel target = $region49
        $region54: #{reverse.0} parent=46 // loop_exit
          _
      $region47: #{reverse.0} parent=38 // pred_fallthru
        _
    $region39: #{reverse.0} parent=1 // pred_fallthru
      _
    %232 = vnop

// kernel: up_forward.10
$region0: #{up_forward.10}
  #allocation0 [shape = 'u32[]', space=smem, size = 0x4, offset = 0x4, fixed_abs, tag = 'smem constant byte address 0x4 - core index']
  #allocation1 [shape = 'u32[144,128]{1,0:T(1,128)}', space=vmem, size = 0x12000, scoped, tag = 'internal scratch']
  %s0 = inlined_call_operand.vmem [shape: bf16[4,72], index: 0, kind: input, shape index: {}]
  %s1 = inlined_call_operand.vmem [shape: bf16[72,512], index: 1, kind: input, shape index: {}]
  %s2 = inlined_call_operand.vmem [shape: f32[4,512], index: 2, kind: output, shape index: {0}]
  %s3 = inlined_call_operand.vmem [shape: f32[1,4,1], index: 3, kind: output, shape index: {1}]
  %s4 = inlined_call_operand.vmem [shape: f32[1,4,1], index: 4, kind: output, shape index: {2}]
  %5 = xla_tuple %s2, %s3, %s4
  %s6 = sld [smem:[#allocation0]]
  $region34: #{up_forward.10} parent=0
    _
  %s8 = ssub.s32 1, %s6
  %s9 = scalar_select 0, %s8, %s6
  // Predicated region
  $region2: #{up_forward.10} parent=0 // pred_check
    _
  $region3: #{up_forward.10} parent=0 // pred_check_branch
    %11 = sbr.rel (0) target = $region5
  $region4: #{up_forward.10} parent=0 // pred_region
    _
  $region5: #{up_forward.10} parent=0 // pred_fallthru
    _
  // Predicated region
  $region6: #{up_forward.10} parent=0 // pred_check
    _
  $region7: #{up_forward.10} parent=0 // pred_check_branch
    %13 = sbr.rel (0) target = $region9
  $region8: #{up_forward.10} parent=0 // pred_region
    _
  $region9: #{up_forward.10} parent=0 // pred_fallthru
    _
  %v15 = vld [vmem:[%s0] sm:$0x3]
  %v16 = vld [vmem:[%s1] sm:$0xff]
  %v17 = vld [vmem:[%s1 + $0x8] sm:$0xff]
  %v18 = vld [vmem:[%s1 + $0x10] sm:$0xff]
  %v19 = vld [vmem:[%s1 + $0x18] sm:$0xff]
  %v20 = vld [vmem:[%s1 + $0x20] sm:$0xff]
  %v21 = vld [vmem:[%s1 + $0x28] sm:$0xff]
  %v22 = vld [vmem:[%s1 + $0x30] sm:$0xff]
  %v23 = vld [vmem:[%s1 + $0x38] sm:$0xff]
  %v24 = vld [vmem:[%s1 + $0x40] sm:$0xff]
  %v25 = vld [vmem:[%s1 + $0x48] sm:$0xff]
  %v26 = vld [vmem:[%s1 + $0x50] sm:$0xff]
  %v27 = vld [vmem:[%s1 + $0x58] sm:$0xff]
  %v28 = vld [vmem:[%s1 + $0x60] sm:$0xff]
  %v29 = vld [vmem:[%s1 + $0x68] sm:$0xff]
  %v30 = vld [vmem:[%s1 + $0x70] sm:$0xff]
  %v31 = vld [vmem:[%s1 + $0x78] sm:$0xff]
  %v32 = vld [vmem:[%s1 + $0x80] sm:$0xff]
  %v33 = vld [vmem:[%s1 + $0x88] sm:$0xff]
  %v52 = vunpack.c.l.b16 %v16
  %v53 = vunpack.c.h.b16 %v16
  %v54 = vunpack.c.l.b16 %v17
  %v55 = vunpack.c.h.b16 %v17
  %v56 = vunpack.c.l.b16 %v18
  %v57 = vunpack.c.h.b16 %v18
  %v58 = vunpack.c.l.b16 %v19
  %v59 = vunpack.c.h.b16 %v19
  %v60 = vunpack.c.l.b16 %v20
  %v61 = vunpack.c.h.b16 %v20
  %v62 = vunpack.c.l.b16 %v21
  %v63 = vunpack.c.h.b16 %v21
  %v64 = vunpack.c.l.b16 %v22
  %v65 = vunpack.c.h.b16 %v22
  %v66 = vunpack.c.l.b16 %v23
  %v67 = vunpack.c.h.b16 %v23
  %v68 = vunpack.c.l.b16 %v24
  %v69 = vunpack.c.h.b16 %v24
  %v70 = vunpack.c.l.b16 %v25
  %v71 = vunpack.c.h.b16 %v25
  %v72 = vunpack.c.l.b16 %v26
  %v73 = vunpack.c.h.b16 %v26
  %v74 = vunpack.c.l.b16 %v27
  %v75 = vunpack.c.h.b16 %v27
  %v76 = vunpack.c.l.b16 %v28
  %v77 = vunpack.c.h.b16 %v28
  %v78 = vunpack.c.l.b16 %v29
  %v79 = vunpack.c.h.b16 %v29
  %v80 = vunpack.c.l.b16 %v30
  %v81 = vunpack.c.h.b16 %v30
  %v82 = vunpack.c.l.b16 %v31
  %v83 = vunpack.c.h.b16 %v31
  %v84 = vunpack.c.l.b16 %v32
  %v85 = vunpack.c.h.b16 %v32
  %v86 = vunpack.c.l.b16 %v33
  %v87 = vunpack.c.h.b16 %v33
  %v88 = vpack.c.b16 %v56, %v52
  %v89 = vpack.c.b16 %v57, %v53
  %v90 = vpack.c.b16 %v58, %v54
  %v91 = vpack.c.b16 %v59, %v55
  %v92 = vpack.c.b16 %v64, %v60
  %v93 = vpack.c.b16 %v65, %v61
  %v94 = vpack.c.b16 %v66, %v62
  %v95 = vpack.c.b16 %v67, %v63
  %v96 = vpack.c.b16 %v72, %v68
  %v97 = vpack.c.b16 %v73, %v69
  %v98 = vpack.c.b16 %v74, %v70
  %v99 = vpack.c.b16 %v75, %v71
  %v100 = vpack.c.b16 %v80, %v76
  %v101 = vpack.c.b16 %v81, %v77
  %v102 = vpack.c.b16 %v82, %v78
  %v103 = vpack.c.b16 %v83, %v79
  %v104 = vpack.c.b16 %v84, %v84
  %v105 = vpack.c.b16 %v85, %v85
  %v106 = vpack.c.b16 %v86, %v86
  %v107 = vpack.c.b16 %v87, %v87
  %vm124 = vcmask 588800
  %v126 = vsel %vm124, %v15, 0
  %vm128 = vcmask 1043456
  %v130 = vsel %vm128, %v104, 0
  %v133 = vsel %vm128, %v105, 0
  %v136 = vsel %vm128, %v106, 0
  %v139 = vsel %vm128, %v107, 0
  %141 = vmatprep.subr.bf16.mxu0 %v89
  %142 = vmatpush1.bf16.msra.mxu0 %v88
  %143 = vmatprep.subr.bf16.mxu0 %v93
  %144 = vmatpush1.bf16.msra.mxu0 %v92
  %145 = vmatprep.subr.bf16.mxu0 %v97
  %146 = vmatpush1.bf16.msra.mxu0 %v96
  %147 = vmatprep.subr.bf16.mxu0 %v101
  %148 = vmatpush1.bf16.msra.mxu0 %v100
  %149 = vmatprep.subr.bf16.mxu0 %v133
  %150 = vmatpush1.bf16.msra.mxu0 %v130
  %151 = vmatprep.subr.bf16.mxu0 0
  %152 = vmatpush1.bf16.msra.mxu0 0
  %153 = vmatprep.subr.bf16.mxu0 0
  %154 = vmatpush1.bf16.msra.mxu0 0
  %155 = vmatprep.subr.bf16.mxu0 0
  %156 = vmatpush1.bf16.msra.mxu0 0
  %157 = vmatprep.subr.bf16.mxu0 0
  %158 = vmatpush1.bf16.msra.mxu0 0
  %159 = vmatprep.subr.bf16.mxu0 0
  %160 = vmatpush1.bf16.msra.mxu0 0
  %161 = vmatprep.subr.bf16.mxu0 0
  %162 = vmatpush1.bf16.msra.mxu0 0
  %163 = vmatprep.subr.bf16.mxu0 0
  %164 = vmatpush1.bf16.msra.mxu0 0
  %165 = vmatprep.subr.bf16.mxu0 0
  %166 = vmatpush1.bf16.msra.mxu0 0
  %167 = vmatprep.subr.bf16.mxu0 0
  %168 = vmatpush1.bf16.msra.mxu0 0
  %169 = vmatprep.subr.bf16.mxu0 0
  %170 = vmatpush1.bf16.msra.mxu0 0
  %171 = vmatprep.subr.bf16.mxu0 0
  %172 = vmatpush1.bf16.msra.mxu0 0
  %173 = vmatprep.mubr.bf16.mxu0 0
  %174 = vmatmul.mubr.bf16.gmra.mrb[0].mxu0 %v126
  %v175 = vpop.f32.mrb[0].mxu0
  %v176 = vadd.f32 0.0, %v175
  %v177 = vpop.f32.mrb[0].mxu0
  %v178 = vadd.f32 0.0, %v177
  %v179 = vpop.f32.mrb[0].mxu0
  %v180 = vpop.f32.mrb[0].mxu0
  %181 = vdwg.mxu0
  %182 = vmatprep.subr.bf16.mxu0 %v91
  %183 = vmatpush1.bf16.msra.mxu0 %v90
  %184 = vmatprep.subr.bf16.mxu0 %v95
  %185 = vmatpush1.bf16.msra.mxu0 %v94
  %186 = vmatprep.subr.bf16.mxu0 %v99
  %187 = vmatpush1.bf16.msra.mxu0 %v98
  %188 = vmatprep.subr.bf16.mxu0 %v103
  %189 = vmatpush1.bf16.msra.mxu0 %v102
  %190 = vmatprep.subr.bf16.mxu0 %v139
  %191 = vmatpush1.bf16.msra.mxu0 %v136
  %192 = vmatprep.subr.bf16.mxu0 0
  %193 = vmatpush1.bf16.msra.mxu0 0
  %194 = vmatprep.subr.bf16.mxu0 0
  %195 = vmatpush1.bf16.msra.mxu0 0
  %196 = vmatprep.subr.bf16.mxu0 0
  %197 = vmatpush1.bf16.msra.mxu0 0
  %198 = vmatprep.subr.bf16.mxu0 0
  %199 = vmatpush1.bf16.msra.mxu0 0
  %200 = vmatprep.subr.bf16.mxu0 0
  %201 = vmatpush1.bf16.msra.mxu0 0
  %202 = vmatprep.subr.bf16.mxu0 0
  %203 = vmatpush1.bf16.msra.mxu0 0
  %204 = vmatprep.subr.bf16.mxu0 0
  %205 = vmatpush1.bf16.msra.mxu0 0
  %206 = vmatprep.subr.bf16.mxu0 0
  %207 = vmatpush1.bf16.msra.mxu0 0
  %208 = vmatprep.subr.bf16.mxu0 0
  %209 = vmatpush1.bf16.msra.mxu0 0
  %210 = vmatprep.subr.bf16.mxu0 0
  %211 = vmatpush1.bf16.msra.mxu0 0
  %212 = vmatprep.subr.bf16.mxu0 0
  %213 = vmatpush1.bf16.msra.mxu0 0
  %214 = vmatprep.mubr.bf16.mxu0 0
  %215 = vmatmul.mubr.bf16.gmra.mrb[0].mxu0 %v126
  %v216 = vpop.f32.mrb[0].mxu0
  %v217 = vadd.f32 0.0, %v216
  %v218 = vpop.f32.mrb[0].mxu0
  %v219 = vadd.f32 0.0, %v218
  %v220 = vpop.f32.mrb[0].mxu0
  %v221 = vpop.f32.mrb[0].mxu0
  %222 = vdwg.mxu0
  %v227 = vcombine.low %v176, %v178
  %v228 = vcombine.low %v217, %v219
  %231 = vst [vmem:[%s2] sm:$0xff] %v227
  %232 = vst [vmem:[%s2 + $0x8] sm:$0xff] %v228
  %v233 = vsel %vm128, %v176, 0.0
  %v234 = vsel %vm128, %v178, 0.0
  %v235 = vadd.f32 %v233, %v234
  %v236 = vsel %vm128, %v217, 0.0
  %v237 = vadd.f32 %v235, %v236
  %v238 = vsel %vm128, %v219, 0.0
  %v239 = vadd.f32 %v237, %v238
  %240 = vadd.xlane.f32.xlu0 %v239
  %v241 = vpop.xlane.xlu0 %240
  %vm242 = vcmask 3072
  %243 = vst.msk [vmem:[%s3] sm:$0xf] %vm242, %v241
  %v244 = vmul.f32 %v176, %v176
  %v245 = vmul.f32 %v178, %v178
  %v246 = vmul.f32 %v217, %v217
  %v247 = vmul.f32 %v219, %v219
  %v248 = vsel %vm128, %v244, 0.0
  %v249 = vsel %vm128, %v245, 0.0
  %v250 = vadd.f32 %v248, %v249
  %v251 = vsel %vm128, %v246, 0.0
  %v252 = vadd.f32 %v250, %v251
  %v253 = vsel %vm128, %v247, 0.0
  %v254 = vadd.f32 %v252, %v253
  %255 = vadd.xlane.f32.xlu0 %v254
  %v256 = vpop.xlane.xlu0 %255
  %257 = vst.msk [vmem:[%s4] sm:$0xf] %vm242, %v256
  // Predicated region
  $region10: #{up_forward.10} parent=0 // pred_check
    _
  $region11: #{up_forward.10} parent=0 // pred_check_branch
    %259 = sbr.rel (0) target = $region13
  $region12: #{up_forward.10} parent=0 // pred_region
    _
  $region13: #{up_forward.10} parent=0 // pred_fallthru
    _
  // Predicated region
  $region14: #{up_forward.10} parent=0 // pred_check
    _
  $region15: #{up_forward.10} parent=0 // pred_check_branch
    %261 = sbr.rel (0) target = $region17
  $region16: #{up_forward.10} parent=0 // pred_region
    _
  $region17: #{up_forward.10} parent=0 // pred_fallthru
    _
  // Predicated region
  $region18: #{up_forward.10} parent=0 // pred_check
    _
  $region19: #{up_forward.10} parent=0 // pred_check_branch
    %263 = sbr.rel (0) target = $region21
  $region20: #{up_forward.10} parent=0 // pred_region
    _
  $region21: #{up_forward.10} parent=0 // pred_fallthru
    _
  // Predicated region
  $region22: #{up_forward.10} parent=0 // pred_check
    _
  $region23: #{up_forward.10} parent=0 // pred_check_branch
    %265 = sbr.rel (0) target = $region25
  $region24: #{up_forward.10} parent=0 // pred_region
    _
  $region25: #{up_forward.10} parent=0 // pred_fallthru
    _
  // Predicated region
  $region26: #{up_forward.10} parent=0 // pred_check
    _
  $region27: #{up_forward.10} parent=0 // pred_check_branch
    %267 = sbr.rel (0) target = $region29
  $region28: #{up_forward.10} parent=0 // pred_region
    _
  $region29: #{up_forward.10} parent=0 // pred_fallthru
    _
  // Predicated region
  $region30: #{up_forward.10} parent=0 // pred_check
    _
  $region31: #{up_forward.10} parent=0 // pred_check_branch
    %269 = sbr.rel (0) target = $region33
  $region32: #{up_forward.10} parent=0 // pred_region
    _
  $region33: #{up_forward.10} parent=0 // pred_fallthru
    _

// kernel: up_forward.11
$region0: #{up_forward.11}
  #allocation0 [shape = 'u32[]', space=smem, size = 0x4, offset = 0x4, fixed_abs, tag = 'smem constant byte address 0x4 - core index']
  #allocation1 [shape = 'u32[144,128]{1,0:T(1,128)}', space=vmem, size = 0x12000, scoped, tag = 'internal scratch']
  %s0 = inlined_call_operand.vmem [shape: f32[4,512], index: 0, kind: input, shape index: {}]
  %s1 = inlined_call_operand.vmem [shape: f32[4,1], index: 1, kind: input, shape index: {}]
  %s2 = inlined_call_operand.vmem [shape: f32[4,1], index: 2, kind: input, shape index: {}]
  %s3 = inlined_call_operand.vmem [shape: f32[4,512], index: 3, kind: output, shape index: {}]
  %s4 = sld [smem:[#allocation0]]
  $region22: #{up_forward.11} parent=0
    _
  %s6 = ssub.s32 1, %s4
  %s7 = scalar_select 0, %s6, %s4
  // Predicated region
  $region2: #{up_forward.11} parent=0 // pred_check
    _
  $region3: #{up_forward.11} parent=0 // pred_check_branch
    %9 = sbr.rel (0) target = $region5
  $region4: #{up_forward.11} parent=0 // pred_region
    _
  $region5: #{up_forward.11} parent=0 // pred_fallthru
    _
  // Predicated region
  $region6: #{up_forward.11} parent=0 // pred_check
    _
  $region7: #{up_forward.11} parent=0 // pred_check_branch
    %11 = sbr.rel (0) target = $region9
  $region8: #{up_forward.11} parent=0 // pred_region
    _
  $region9: #{up_forward.11} parent=0 // pred_fallthru
    _
  // Predicated region
  $region10: #{up_forward.11} parent=0 // pred_check
    _
  $region11: #{up_forward.11} parent=0 // pred_check_branch
    %13 = sbr.rel (0) target = $region13
  $region12: #{up_forward.11} parent=0 // pred_region
    _
  $region13: #{up_forward.11} parent=0 // pred_fallthru
    _
  %v14 = vld [vmem:[%s0] sm:$0xff]
  %v15 = vld [vmem:[%s0 + $0x8] sm:$0xff]
  %v16 = vld [vmem:[%s1] sm:$0xf]
  %18 = vset.pattern.permute.xlu0 0
  %19 = vperm.xlu0 %18, %v16
  %v20 = vpop.permute.xlu0 %19
  %v22 = vunpack.c.l.s4 839922192
  %v23 = vunpack.c.0.s8 %v22
  %v24 = vlaneseq
  %v25 = vshrl.u32 %v24, 7
  %v26 = vsub.s32 %v23, %v25
  %v27 = vrot.slane %v20, %v26
  %v29 = vmul.f32 %v14, %v27
  %v30 = vmul.f32 %v15, %v27
  %v31 = vld [vmem:[%s2] sm:$0xf]
  %33 = vset.pattern.permute.xlu0 0
  %34 = vperm.xlu0 %33, %v31
  %v35 = vpop.permute.xlu0 %34
  %v37 = vunpack.c.l.s4 839922192
  %v38 = vunpack.c.0.s8 %v37
  %v39 = vlaneseq
  %v40 = vshrl.u32 %v39, 7
  %v41 = vsub.s32 %v38, %v40
  %v42 = vrot.slane %v35, %v41
  %v44 = vadd.f32 %v29, %v42
  %v45 = vadd.f32 %v30, %v42
  %vm46 = vcmp.ge.f32.partialorder %v44, 0.0
  %vm47 = vcmp.ge.f32.partialorder %v45, 0.0
  %v48 = vmul.f32 %v44, 0.01
  %v49 = vmul.f32 %v45, 0.01
  %v50 = vsel %vm46, %v44, %v48
  %v51 = vsel %vm47, %v45, %v49
  %s52 = smul.u32 0, 512
  %v53 = vlaneseq
  %v54 = vand.u32 %v53, 127
  %v55 = vadd.s32 %v54, 128
  %v56 = vadd.s32 %v54, 256
  %v57 = vadd.s32 %v54, 384
  %v58 = vstv %s52
  %v59 = vadd.s32 %v54, %v58
  %v60 = vadd.s32 %v55, %v58
  %v61 = vadd.s32 %v56, %v58
  %v62 = vadd.s32 %v57, %v58
  %vm63 = vcmp.lt.s32.totalorder %v59, 512
  %vm64 = vcmp.lt.s32.totalorder %v60, 512
  %vm65 = vcmp.lt.s32.totalorder %v61, 512
  %vm66 = vcmp.lt.s32.totalorder %v62, 512
  %v69 = vcombine.high %v50, %v50
  %v70 = vcombine.high %v51, %v51
  %v73 = vsel %vm63, %v50, 0.0
  %v74 = vsel %vm64, %v69, 0.0
  %v75 = vsel %vm65, %v51, 0.0
  %v76 = vsel %vm66, %v70, 0.0
  %v81 = vcombine.low %v73, %v74
  %v82 = vcombine.low %v75, %v76
  %85 = vst [vmem:[%s3] sm:$0xff] %v81
  %86 = vst [vmem:[%s3 + $0x8] sm:$0xff] %v82
  // Predicated region
  $region14: #{up_forward.11} parent=0 // pred_check
    _
  $region15: #{up_forward.11} parent=0 // pred_check_branch
    %88 = sbr.rel (0) target = $region17
  $region16: #{up_forward.11} parent=0 // pred_region
    _
  $region17: #{up_forward.11} parent=0 // pred_fallthru
    _
  // Predicated region
  $region18: #{up_forward.11} parent=0 // pred_check
    _
  $region19: #{up_forward.11} parent=0 // pred_check_branch
    %90 = sbr.rel (0) target = $region21
  $region20: #{up_forward.11} parent=0 // pred_region
    _
  $region21: #{up_forward.11} parent=0 // pred_fallthru
    _

// kernel: up_forward.17
$region0: #{up_forward.17}
  #allocation0 [shape = 'u32[]', space=smem, size = 0x4, offset = 0x4, fixed_abs, tag = 'smem constant byte address 0x4 - core index']
  #allocation1 [shape = 'u32[144,128]{1,0:T(1,128)}', space=vmem, size = 0x12000, scoped, tag = 'internal scratch']
  %s0 = inlined_call_operand.vmem [shape: f32[4,512], index: 0, kind: input, shape index: {}]
  %s1 = inlined_call_operand.vmem [shape: f32[4,1], index: 1, kind: input, shape index: {}]
  %s2 = inlined_call_operand.vmem [shape: f32[4,1], index: 2, kind: input, shape index: {}]
  %s3 = inlined_call_operand.vmem [shape: f32[4,512], index: 3, kind: input, shape index: {}]
  %s4 = inlined_call_operand.vmem [shape: f32[4,512], index: 4, kind: output, shape index: {}]
  %s5 = sld [smem:[#allocation0]]
  $region26: #{up_forward.17} parent=0
    _
  %s7 = ssub.s32 1, %s5
  %s8 = scalar_select 0, %s7, %s5
  // Predicated region
  $region2: #{up_forward.17} parent=0 // pred_check
    _
  $region3: #{up_forward.17} parent=0 // pred_check_branch
    %10 = sbr.rel (0) target = $region5
  $region4: #{up_forward.17} parent=0 // pred_region
    _
  $region5: #{up_forward.17} parent=0 // pred_fallthru
    _
  // Predicated region
  $region6: #{up_forward.17} parent=0 // pred_check
    _
  $region7: #{up_forward.17} parent=0 // pred_check_branch
    %12 = sbr.rel (0) target = $region9
  $region8: #{up_forward.17} parent=0 // pred_region
    _
  $region9: #{up_forward.17} parent=0 // pred_fallthru
    _
  // Predicated region
  $region10: #{up_forward.17} parent=0 // pred_check
    _
  $region11: #{up_forward.17} parent=0 // pred_check_branch
    %14 = sbr.rel (0) target = $region13
  $region12: #{up_forward.17} parent=0 // pred_region
    _
  $region13: #{up_forward.17} parent=0 // pred_fallthru
    _
  // Predicated region
  $region14: #{up_forward.17} parent=0 // pred_check
    _
  $region15: #{up_forward.17} parent=0 // pred_check_branch
    %16 = sbr.rel (0) target = $region17
  $region16: #{up_forward.17} parent=0 // pred_region
    _
  $region17: #{up_forward.17} parent=0 // pred_fallthru
    _
  %v17 = vld [vmem:[%s0] sm:$0xff]
  %v18 = vld [vmem:[%s0 + $0x8] sm:$0xff]
  %v19 = vld [vmem:[%s1] sm:$0xf]
  %21 = vset.pattern.permute.xlu0 0
  %22 = vperm.xlu0 %21, %v19
  %v23 = vpop.permute.xlu0 %22
  %v25 = vunpack.c.l.s4 839922192
  %v26 = vunpack.c.0.s8 %v25
  %v27 = vlaneseq
  %v28 = vshrl.u32 %v27, 7
  %v29 = vsub.s32 %v26, %v28
  %v30 = vrot.slane %v23, %v29
  %v32 = vmul.f32 %v17, %v30
  %v33 = vmul.f32 %v18, %v30
  %v34 = vld [vmem:[%s2] sm:$0xf]
  %36 = vset.pattern.permute.xlu0 0
  %37 = vperm.xlu0 %36, %v34
  %v38 = vpop.permute.xlu0 %37
  %v40 = vunpack.c.l.s4 839922192
  %v41 = vunpack.c.0.s8 %v40
  %v42 = vlaneseq
  %v43 = vshrl.u32 %v42, 7
  %v44 = vsub.s32 %v41, %v43
  %v45 = vrot.slane %v38, %v44
  %v47 = vadd.f32 %v32, %v45
  %v48 = vadd.f32 %v33, %v45
  %vm49 = vcmp.ge.f32.partialorder %v47, 0.0
  %vm50 = vcmp.ge.f32.partialorder %v48, 0.0
  %v51 = vmul.f32 %v47, 0.01
  %v52 = vmul.f32 %v48, 0.01
  %v53 = vsel %vm49, %v47, %v51
  %v54 = vsel %vm50, %v48, %v52
  %v55 = vld [vmem:[%s3] sm:$0xff]
  %v56 = vld [vmem:[%s3 + $0x8] sm:$0xff]
  %v57 = vadd.f32 %v53, %v55
  %v58 = vadd.f32 %v54, %v56
  %s59 = smul.u32 0, 512
  %v60 = vlaneseq
  %v61 = vand.u32 %v60, 127
  %v62 = vadd.s32 %v61, 128
  %v63 = vadd.s32 %v61, 256
  %v64 = vadd.s32 %v61, 384
  %v65 = vstv %s59
  %v66 = vadd.s32 %v61, %v65
  %v67 = vadd.s32 %v62, %v65
  %v68 = vadd.s32 %v63, %v65
  %v69 = vadd.s32 %v64, %v65
  %vm70 = vcmp.lt.s32.totalorder %v66, 512
  %vm71 = vcmp.lt.s32.totalorder %v67, 512
  %vm72 = vcmp.lt.s32.totalorder %v68, 512
  %vm73 = vcmp.lt.s32.totalorder %v69, 512
  %v76 = vcombine.high %v57, %v57
  %v77 = vcombine.high %v58, %v58
  %v80 = vsel %vm70, %v57, 0.0
  %v81 = vsel %vm71, %v76, 0.0
  %v82 = vsel %vm72, %v58, 0.0
  %v83 = vsel %vm73, %v77, 0.0
  %v88 = vcombine.low %v80, %v81
  %v89 = vcombine.low %v82, %v83
  %92 = vst [vmem:[%s4] sm:$0xff] %v88
  %93 = vst [vmem:[%s4 + $0x8] sm:$0xff] %v89
  // Predicated region
  $region18: #{up_forward.17} parent=0 // pred_check
    _
  $region19: #{up_forward.17} parent=0 // pred_check_branch
    %95 = sbr.rel (0) target = $region21
  $region20: #{up_forward.17} parent=0 // pred_region
    _
  $region21: #{up_forward.17} parent=0 // pred_fallthru
    _
  // Predicated region
  $region22: #{up_forward.17} parent=0 // pred_check
    _
  $region23: #{up_forward.17} parent=0 // pred_check_branch
    %97 = sbr.rel (0) target = $region25
  $region24: #{up_forward.17} parent=0 // pred_region
    _
  $region25: #{up_forward.17} parent=0 // pred_fallthru
    _

// kernel: up_forward.12
$region0: #{up_forward.12}
  #allocation0 [shape = 'u32[]', space=smem, size = 0x4, offset = 0x4, fixed_abs, tag = 'smem constant byte address 0x4 - core index']
  #allocation1 [shape = 'u32[144,128]{1,0:T(1,128)}', space=vmem, size = 0x12000, scoped, tag = 'internal scratch']
  %s0 = inlined_call_operand.vmem [shape: bf16[4,36], index: 0, kind: input, shape index: {}]
  %s1 = inlined_call_operand.vmem [shape: bf16[36,512], index: 1, kind: input, shape index: {}]
  %s2 = inlined_call_operand.vmem [shape: f32[4,512], index: 2, kind: output, shape index: {0}]
  %s3 = inlined_call_operand.vmem [shape: f32[1,4,1], index: 3, kind: output, shape index: {1}]
  %s4 = inlined_call_operand.vmem [shape: f32[1,4,1], index: 4, kind: output, shape index: {2}]
  %5 = xla_tuple %s2, %s3, %s4
  %s6 = sld [smem:[#allocation0]]
  $region34: #{up_forward.12} parent=0
    _
  %s8 = ssub.s32 1, %s6
  %s9 = scalar_select 0, %s8, %s6
  // Predicated region
  $region2: #{up_forward.12} parent=0 // pred_check
    _
  $region3: #{up_forward.12} parent=0 // pred_check_branch
    %11 = sbr.rel (0) target = $region5
  $region4: #{up_forward.12} parent=0 // pred_region
    _
  $region5: #{up_forward.12} parent=0 // pred_fallthru
    _
  // Predicated region
  $region6: #{up_forward.12} parent=0 // pred_check
    _
  $region7: #{up_forward.12} parent=0 // pred_check_branch
    %13 = sbr.rel (0) target = $region9
  $region8: #{up_forward.12} parent=0 // pred_region
    _
  $region9: #{up_forward.12} parent=0 // pred_fallthru
    _
  %v15 = vld [vmem:[%s0] sm:$0x3]
  %v16 = vld [vmem:[%s1] sm:$0xff]
  %v17 = vld [vmem:[%s1 + $0x8] sm:$0xff]
  %v18 = vld [vmem:[%s1 + $0x10] sm:$0xff]
  %v19 = vld [vmem:[%s1 + $0x18] sm:$0xff]
  %v20 = vld [vmem:[%s1 + $0x20] sm:$0xff]
  %v21 = vld [vmem:[%s1 + $0x28] sm:$0xff]
  %v22 = vld [vmem:[%s1 + $0x30] sm:$0xff]
  %v23 = vld [vmem:[%s1 + $0x38] sm:$0xff]
  %v24 = vld [vmem:[%s1 + $0x40] sm:$0x33]
  %v25 = vld [vmem:[%s1 + $0x48] sm:$0x33]
  %v36 = vunpack.c.l.b16 %v16
  %v37 = vunpack.c.h.b16 %v16
  %v38 = vunpack.c.l.b16 %v17
  %v39 = vunpack.c.h.b16 %v17
  %v40 = vunpack.c.l.b16 %v18
  %v41 = vunpack.c.h.b16 %v18
  %v42 = vunpack.c.l.b16 %v19
  %v43 = vunpack.c.h.b16 %v19
  %v44 = vunpack.c.l.b16 %v20
  %v45 = vunpack.c.h.b16 %v20
  %v46 = vunpack.c.l.b16 %v21
  %v47 = vunpack.c.h.b16 %v21
  %v48 = vunpack.c.l.b16 %v22
  %v49 = vunpack.c.h.b16 %v22
  %v50 = vunpack.c.l.b16 %v23
  %v51 = vunpack.c.h.b16 %v23
  %v52 = vunpack.c.l.b16 %v24
  %v53 = vunpack.c.h.b16 %v24
  %v54 = vunpack.c.l.b16 %v25
  %v55 = vunpack.c.h.b16 %v25
  %v56 = vpack.c.b16 %v40, %v36
  %v57 = vpack.c.b16 %v41, %v37
  %v58 = vpack.c.b16 %v42, %v38
  %v59 = vpack.c.b16 %v43, %v39
  %v60 = vpack.c.b16 %v48, %v44
  %v61 = vpack.c.b16 %v49, %v45
  %v62 = vpack.c.b16 %v50, %v46
  %v63 = vpack.c.b16 %v51, %v47
  %v64 = vpack.c.b16 %v52, %v52
  %v65 = vpack.c.b16 %v53, %v53
  %v66 = vpack.c.b16 %v54, %v54
  %v67 = vpack.c.b16 %v55, %v55
  %vm76 = vcmask 293888
  %v78 = vsel %vm76, %v15, 0
  %vm80 = vcmask 1041408
  %v82 = vsel %vm80, %v64, 0
  %v85 = vsel %vm80, %v65, 0
  %v88 = vsel %vm80, %v66, 0
  %v91 = vsel %vm80, %v67, 0
  %93 = vmatprep.subr.bf16.mxu0 %v57
  %94 = vmatpush1.bf16.msra.mxu0 %v56
  %95 = vmatprep.subr.bf16.mxu0 %v61
  %96 = vmatpush1.bf16.msra.mxu0 %v60
  %97 = vmatprep.subr.bf16.mxu0 %v85
  %98 = vmatpush1.bf16.msra.mxu0 %v82
  %99 = vmatprep.subr.bf16.mxu0 0
  %100 = vmatpush1.bf16.msra.mxu0 0
  %101 = vmatprep.subr.bf16.mxu0 0
  %102 = vmatpush1.bf16.msra.mxu0 0
  %103 = vmatprep.subr.bf16.mxu0 0
  %104 = vmatpush1.bf16.msra.mxu0 0
  %105 = vmatprep.subr.bf16.mxu0 0
  %106 = vmatpush1.bf16.msra.mxu0 0
  %107 = vmatprep.subr.bf16.mxu0 0
  %108 = vmatpush1.bf16.msra.mxu0 0
  %109 = vmatprep.subr.bf16.mxu0 0
  %110 = vmatpush1.bf16.msra.mxu0 0
  %111 = vmatprep.subr.bf16.mxu0 0
  %112 = vmatpush1.bf16.msra.mxu0 0
  %113 = vmatprep.subr.bf16.mxu0 0
  %114 = vmatpush1.bf16.msra.mxu0 0
  %115 = vmatprep.subr.bf16.mxu0 0
  %116 = vmatpush1.bf16.msra.mxu0 0
  %117 = vmatprep.subr.bf16.mxu0 0
  %118 = vmatpush1.bf16.msra.mxu0 0
  %119 = vmatprep.subr.bf16.mxu0 0
  %120 = vmatpush1.bf16.msra.mxu0 0
  %121 = vmatprep.subr.bf16.mxu0 0
  %122 = vmatpush1.bf16.msra.mxu0 0
  %123 = vmatprep.subr.bf16.mxu0 0
  %124 = vmatpush1.bf16.msra.mxu0 0
  %125 = vmatprep.mubr.bf16.mxu0 0
  %126 = vmatmul.mubr.bf16.gmra.mrb[0].mxu0 %v78
  %v127 = vpop.f32.mrb[0].mxu0
  %v128 = vadd.f32 0.0, %v127
  %v129 = vpop.f32.mrb[0].mxu0
  %v130 = vadd.f32 0.0, %v129
  %v131 = vpop.f32.mrb[0].mxu0
  %v132 = vpop.f32.mrb[0].mxu0
  %133 = vdwg.mxu0
  %134 = vmatprep.subr.bf16.mxu0 %v59
  %135 = vmatpush1.bf16.msra.mxu0 %v58
  %136 = vmatprep.subr.bf16.mxu0 %v63
  %137 = vmatpush1.bf16.msra.mxu0 %v62
  %138 = vmatprep.subr.bf16.mxu0 %v91
  %139 = vmatpush1.bf16.msra.mxu0 %v88
  %140 = vmatprep.subr.bf16.mxu0 0
  %141 = vmatpush1.bf16.msra.mxu0 0
  %142 = vmatprep.subr.bf16.mxu0 0
  %143 = vmatpush1.bf16.msra.mxu0 0
  %144 = vmatprep.subr.bf16.mxu0 0
  %145 = vmatpush1.bf16.msra.mxu0 0
  %146 = vmatprep.subr.bf16.mxu0 0
  %147 = vmatpush1.bf16.msra.mxu0 0
  %148 = vmatprep.subr.bf16.mxu0 0
  %149 = vmatpush1.bf16.msra.mxu0 0
  %150 = vmatprep.subr.bf16.mxu0 0
  %151 = vmatpush1.bf16.msra.mxu0 0
  %152 = vmatprep.subr.bf16.mxu0 0
  %153 = vmatpush1.bf16.msra.mxu0 0
  %154 = vmatprep.subr.bf16.mxu0 0
  %155 = vmatpush1.bf16.msra.mxu0 0
  %156 = vmatprep.subr.bf16.mxu0 0
  %157 = vmatpush1.bf16.msra.mxu0 0
  %158 = vmatprep.subr.bf16.mxu0 0
  %159 = vmatpush1.bf16.msra.mxu0 0
  %160 = vmatprep.subr.bf16.mxu0 0
  %161 = vmatpush1.bf16.msra.mxu0 0
  %162 = vmatprep.subr.bf16.mxu0 0
  %163 = vmatpush1.bf16.msra.mxu0 0
  %164 = vmatprep.subr.bf16.mxu0 0
  %165 = vmatpush1.bf16.msra.mxu0 0
  %166 = vmatprep.mubr.bf16.mxu0 0
  %167 = vmatmul.mubr.bf16.gmra.mrb[0].mxu0 %v78
  %v168 = vpop.f32.mrb[0].mxu0
  %v169 = vadd.f32 0.0, %v168
  %v170 = vpop.f32.mrb[0].mxu0
  %v171 = vadd.f32 0.0, %v170
  %v172 = vpop.f32.mrb[0].mxu0
  %v173 = vpop.f32.mrb[0].mxu0
  %174 = vdwg.mxu0
  %v179 = vcombine.low %v128, %v130
  %v180 = vcombine.low %v169, %v171
  %183 = vst [vmem:[%s2] sm:$0xff] %v179
  %184 = vst [vmem:[%s2 + $0x8] sm:$0xff] %v180
  %vm185 = vcmask 1043456
  %v186 = vsel %vm185, %v128, 0.0
  %v187 = vsel %vm185, %v130, 0.0
  %v188 = vadd.f32 %v186, %v187
  %v189 = vsel %vm185, %v169, 0.0
  %v190 = vadd.f32 %v188, %v189
  %v191 = vsel %vm185, %v171, 0.0
  %v192 = vadd.f32 %v190, %v191
  %193 = vadd.xlane.f32.xlu0 %v192
  %v194 = vpop.xlane.xlu0 %193
  %vm195 = vcmask 3072
  %196 = vst.msk [vmem:[%s3] sm:$0xf] %vm195, %v194
  %v197 = vmul.f32 %v128, %v128
  %v198 = vmul.f32 %v130, %v130
  %v199 = vmul.f32 %v169, %v169
  %v200 = vmul.f32 %v171, %v171
  %v201 = vsel %vm185, %v197, 0.0
  %v202 = vsel %vm185, %v198, 0.0
  %v203 = vadd.f32 %v201, %v202
  %v204 = vsel %vm185, %v199, 0.0
  %v205 = vadd.f32 %v203, %v204
  %v206 = vsel %vm185, %v200, 0.0
  %v207 = vadd.f32 %v205, %v206
  %208 = vadd.xlane.f32.xlu0 %v207
  %v209 = vpop.xlane.xlu0 %208
  %210 = vst.msk [vmem:[%s4] sm:$0xf] %vm195, %v209
  // Predicated region
  $region10: #{up_forward.12} parent=0 // pred_check
    _
  $region11: #{up_forward.12} parent=0 // pred_check_branch
    %212 = sbr.rel (0) target = $region13
  $region12: #{up_forward.12} parent=0 // pred_region
    _
  $region13: #{up_forward.12} parent=0 // pred_fallthru
    _
  // Predicated region
  $region14: #{up_forward.12} parent=0 // pred_check
    _
  $region15: #{up_forward.12} parent=0 // pred_check_branch
    %214 = sbr.rel (0) target = $region17
  $region16: #{up_forward.12} parent=0 // pred_region
    _
  $region17: #{up_forward.12} parent=0 // pred_fallthru
    _
  // Predicated region
  $region18: #{up_forward.12} parent=0 // pred_check
    _
  $region19: #{up_forward.12} parent=0 // pred_check_branch
    %216 = sbr.rel (0) target = $region21
  $region20: #{up_forward.12} parent=0 // pred_region
    _
  $region21: #{up_forward.12} parent=0 // pred_fallthru
    _
  // Predicated region
  $region22: #{up_forward.12} parent=0 // pred_check
    _
  $region23: #{up_forward.12} parent=0 // pred_check_branch
    %218 = sbr.rel (0) target = $region25
  $region24: #{up_forward.12} parent=0 // pred_region
    _
  $region25: #{up_forward.12} parent=0 // pred_fallthru
    _
  // Predicated region
  $region26: #{up_forward.12} parent=0 // pred_check
    _
  $region27: #{up_forward.12} parent=0 // pred_check_branch
    %220 = sbr.rel (0) target = $region29
  $region28: #{up_forward.12} parent=0 // pred_region
    _
  $region29: #{up_forward.12} parent=0 // pred_fallthru
    _
  // Predicated region
  $region30: #{up_forward.12} parent=0 // pred_check
    _
  $region31: #{up_forward.12} parent=0 // pred_check_branch
    %222 = sbr.rel (0) target = $region33
  $region32: #{up_forward.12} parent=0 // pred_region
    _
  $region33: #{up_forward.12} parent=0 // pred_fallthru
    _

</llo_original>
